<compile_context>
chip_gen: v5e
topology: v5e:2x2
jax: 0.10.0
libtpu: 0.0.40
codegen_flags: <defaults>
</compile_context>

<pallas_src>
import jax
import jax.numpy as jnp
from jax import lax
from jax.experimental import pallas as pl
from jax.experimental.pallas import tpu as pltpu

D_MODEL = 32
N_HEADS = 4
D_HEAD = D_MODEL // N_HEADS
D_FF = 64
EPS = 1e-6
NEG_INF = -1e9

# Lane offsets into the packed (D_MODEL, 8*D_MODEL + D_FF) weight slab.
_OFF_QKV1 = 0
_OFF_Q2 = 3 * D_MODEL
_OFF_KV2 = 4 * D_MODEL
_OFF_WO1 = 6 * D_MODEL
_OFF_WO2 = 7 * D_MODEL
_OFF_W1 = 8 * D_MODEL


# ------------------------------ kernel-side math ------------------------------

def _ln(x, gamma, beta):
    # Tutorial LayerNorm: unbiased variance; eps folded inside the sqrt so the
    # whole tail is a single EUP rsqrt (deviation from (std+eps) is O(eps)).
    mean = jnp.mean(x, axis=-1, keepdims=True)
    var = jnp.sum((x - mean) ** 2, axis=-1, keepdims=True) * (1.0 / (x.shape[-1] - 1))
    return gamma * (x - mean) * lax.rsqrt(var + EPS) + beta


def _split_heads(x3, off):
    # x3: (B, S, W) with head h of this tensor living in lanes
    # [off + h*Dh, off + (h+1)*Dh).  Returns (H*B, S, Dh) with batch index
    # h*B + b, built from static lane slices + one leading-axis concat only.
    return jnp.concatenate(
        [x3[:, :, off + h * D_HEAD: off + (h + 1) * D_HEAD]
         for h in range(N_HEADS)], axis=0)


def _merge_heads(ctx, batch, seq):
    # (H*B, S, Dh) -> (B*S, H*Dh): head h returns to lanes [h*Dh, (h+1)*Dh),
    # so one (B*S, D)@(D, D) matmul against the original Wo reproduces
    # concat(heads) @ Wo exactly.
    rows = jnp.concatenate(
        [ctx[h * batch:(h + 1) * batch] for h in range(N_HEADS)], axis=-1)
    return rows.reshape(batch * seq, N_HEADS * D_HEAD)


def _attention(q, k, v, bias):
    # q: (H*B, Sq, Dh); k, v: (H*B, Sk, Dh); bias: (B, Sq|1, Sk) additive.
    # One batched score einsum + one batched context einsum for all heads and
    # batches; the bias is added via broadcasting (never tiled per head).
    hb, sq, _ = q.shape
    sk = k.shape[1]
    b = bias.shape[0]
    s = jnp.einsum('bqd,bkd->bqk', q, k, preferred_element_type=jnp.float32)
    s = s.reshape(N_HEADS, b, sq, sk) + bias
    s = s - jnp.max(s, axis=-1, keepdims=True)
    p = jnp.exp(s)
    p = p / jnp.sum(p, axis=-1, keepdims=True)          # exact row-normalize
    return jnp.einsum('bqk,bkd->bqd', p.reshape(hb, sq, sk), v,
                      preferred_element_type=jnp.float32)


# ----------------------------------- kernel -----------------------------------

def decoder_block_kernel(x_ref, enc_ref, tgt_mask_ref, src_mask_ref,
                         w_ref, w2_ref, vec_ref, out_ref):
    B, S_tgt, _ = tgt_mask_ref.shape
    S_src = src_mask_ref.shape[-1]

    x = x_ref[...]                      # (B*S_tgt, D), folded in the wrapper
    enc = enc_ref[...]                  # (B*S_src, D)
    w = w_ref[...]                      # (D, 8D + D_FF) packed weight slab
    vecs = vec_ref[...]                 # (8, D_FF) packed LN/bias vectors

    wqkv1 = w[:, _OFF_QKV1:_OFF_Q2]            # (D, 3D), 1/sqrt(Dh) folded in Q
    wq2 = w[:, _OFF_Q2:_OFF_KV2]               # (D, D), scaled
    wkv2 = w[:, _OFF_KV2:_OFF_WO1]             # (D, 2D)
    wo1 = w[:, _OFF_WO1:_OFF_WO2]              # (D, D)
    wo2 = w[:, _OFF_WO2:_OFF_W1]               # (D, D)
    w1 = w[:, _OFF_W1:_OFF_W1 + D_FF]          # (D, D_FF)
    w2 = w2_ref[...]                           # (D_FF, D)

    ln1_g, ln1_b = vecs[0:1, :D_MODEL], vecs[1:2, :D_MODEL]
    ln2_g, ln2_b = vecs[2:3, :D_MODEL], vecs[3:4, :D_MODEL]
    ln3_g, ln3_b = vecs[4:5, :D_MODEL], vecs[5:6, :D_MODEL]
    b1 = vecs[6:7, :D_FF]
    b2 = vecs[7:8, :D_MODEL]

    # Additive attention biases, computed once and never replicated per head.
    tgt_bias = jnp.where(tgt_mask_ref[...] < 0.5,
                         jnp.float32(NEG_INF), jnp.float32(0.0))   # (B,Sq,Sq)
    src_bias = jnp.where(src_mask_ref[...] < 0.5,
                         jnp.float32(NEG_INF), jnp.float32(0.0))   # (B,1,Ss)

    # ---- residual 1: self-attention -----------------------------------------
    h1 = _ln(x, ln1_g, ln1_b)
    qkv = jnp.dot(h1, wqkv1, preferred_element_type=jnp.float32)   # one MXU push
    qkv = qkv.reshape(B, S_tgt, 3 * D_MODEL)
    ctx = _attention(_split_heads(qkv, 0),
                     _split_heads(qkv, D_MODEL),
                     _split_heads(qkv, 2 * D_MODEL), tgt_bias)
    x = x + jnp.dot(_merge_heads(ctx, B, S_tgt), wo1,
                    preferred_element_type=jnp.float32)

    # ---- residual 2: cross-attention ----------------------------------------
    h2 = _ln(x, ln2_g, ln2_b)
    q2 = jnp.dot(h2, wq2, preferred_element_type=jnp.float32)
    q2 = q2.reshape(B, S_tgt, D_MODEL)
    kv = jnp.dot(enc, wkv2, preferred_element_type=jnp.float32)    # one MXU push
    kv = kv.reshape(B, S_src, 2 * D_MODEL)
    ctx2 = _attention(_split_heads(q2, 0),
                      _split_heads(kv, 0),
                      _split_heads(kv, D_MODEL), src_bias)
    x = x + jnp.dot(_merge_heads(ctx2, B, S_tgt), wo2,
                    preferred_element_type=jnp.float32)

    # ---- residual 3: feed-forward (linear -> relu -> linear) -----------------
    h3 = _ln(x, ln3_g, ln3_b)
    ff = jnp.maximum(
        jnp.dot(h3, w1, preferred_element_type=jnp.float32) + b1, 0.0)
    ff = jnp.dot(ff, w2, preferred_element_type=jnp.float32) + b2

    out_ref[...] = x + ff


# ---------------------------------- wrapper ------------------------------------

def decoder_block(x, enc, src_mask, tgt_mask, params):
    (ln1_g, ln1_b, wq1, wk1, wv1, wo1,
     ln2_g, ln2_b, wq2, wk2, wv2, wo2,
     ln3_g, ln3_b, w1, b1, w2, b2) = params
    B, S_tgt, _ = x.shape
    S_src = enc.shape[1]

    scale = 1.0 / jnp.sqrt(jnp.float32(D_HEAD))
    # Lane-packed weight slab: one DMA, one wide 2-D matmul per projection
    # group; attention scale folded into the query weights.
    w_slab = jnp.concatenate([wq1 * scale, wk1, wv1,     # QKV1 -> (D, 3D)
                              wq2 * scale,               # Q2   -> (D, D)
                              wk2, wv2,                  # KV2  -> (D, 2D)
                              wo1, wo2, w1], axis=1)     # (D, 8D + D_FF)

    def pad_row(v):                                      # pad lanes to D_FF
        return jnp.pad(v, ((0, 0), (0, D_FF - v.shape[1])))
    vecs = jnp.concatenate([pad_row(ln1_g), pad_row(ln1_b),
                            pad_row(ln2_g), pad_row(ln2_b),
                            pad_row(ln3_g), pad_row(ln3_b),
                            b1, pad_row(b2)], axis=0)    # (8, D_FF)

    # Fold batch into rows outside the kernel (free XLA reshape); the kernel
    # loads/stores contiguous lane-dense 2-D slabs only.
    x2 = x.reshape(B * S_tgt, D_MODEL)
    enc2 = enc.reshape(B * S_src, D_MODEL)

    vmem = pl.BlockSpec(memory_space=pltpu.MemorySpace.VMEM)
    out2 = pl.pallas_call(
        decoder_block_kernel,
        out_shape=jax.ShapeDtypeStruct((B * S_tgt, D_MODEL), jnp.float32),
        in_specs=[vmem] * 7,
        out_specs=vmem,
    )(x2, enc2, tgt_mask, src_mask, w_slab, w2, vecs)
    return out2.reshape(B, S_tgt, D_MODEL)


# ------------------------------ pure-JAX reference -----------------------------

def _layernorm_ref(x, gamma, beta):
    mean = jnp.mean(x, axis=-1, keepdims=True)
    var = jnp.sum((x - mean) ** 2, axis=-1, keepdims=True) / (x.shape[-1] - 1)
    std = jnp.sqrt(var)
    return gamma * (x - mean) / (std + EPS) + beta


def _mha_ref(q_in, k_in, v_in, mask2d, wq, wk, wv, wo):
    q = jnp.dot(q_in, wq)
    k = jnp.dot(k_in, wk)
    v = jnp.dot(v_in, wv)
    scale = 1.0 / jnp.sqrt(jnp.float32(D_HEAD))
    outs = []
    for h in range(N_HEADS):
        sl = slice(h * D_HEAD, (h + 1) * D_HEAD)
        qh, kh, vh = q[:, sl], k[:, sl], v[:, sl]
        s = jnp.dot(qh, kh.T) * scale
        s = jnp.where(mask2d == 0.0, jnp.float32(NEG_INF), s)
        s = s - jnp.max(s, axis=-1, keepdims=True)
        p = jnp.exp(s)
        p = p / jnp.sum(p, axis=-1, keepdims=True)
        outs.append(jnp.dot(p, vh))
    concat = jnp.concatenate(outs, axis=-1)
    return jnp.dot(concat, wo)


def decoder_block_ref(x, enc, src_mask, tgt_mask, params):
    (ln1_g, ln1_b, wq1, wk1, wv1, wo1,
     ln2_g, ln2_b, wq2, wk2, wv2, wo2,
     ln3_g, ln3_b, w1, b1, w2, b2) = params
    outs = []
    for b in range(x.shape[0]):
        xb, eb = x[b], enc[b]
        sm, tm = src_mask[b], tgt_mask[b]
        h1 = _layernorm_ref(xb, ln1_g, ln1_b)
        xb = xb + _mha_ref(h1, h1, h1, tm, wq1, wk1, wv1, wo1)
        h2 = _layernorm_ref(xb, ln2_g, ln2_b)
        xb = xb + _mha_ref(h2, eb, eb, sm, wq2, wk2, wv2, wo2)
        h3 = _layernorm_ref(xb, ln3_g, ln3_b)
        ff = jnp.maximum(jnp.dot(h3, w1) + b1, 0.0)
        ff = jnp.dot(ff, w2) + b2
        outs.append(xb + ff)
    return jnp.stack(outs)


# --------------------------------- param init -----------------------------------

def init_params(key):
    ks = jax.random.split(key, 12)
    w = lambda k, s: (0.02 * jax.random.normal(k, s)).astype(jnp.float32)
    ones = jnp.ones((1, D_MODEL), jnp.float32)
    zeros = jnp.zeros((1, D_MODEL), jnp.float32)
    return [
        # LN1 + self-attention (w_q, w_k, w_v, w_o : bias-free)
        ones, zeros,
        w(ks[0], (D_MODEL, D_MODEL)), w(ks[1], (D_MODEL, D_MODEL)),
        w(ks[2], (D_MODEL, D_MODEL)), w(ks[3], (D_MODEL, D_MODEL)),
        # LN2 + cross-attention
        ones, zeros,
        w(ks[4], (D_MODEL, D_MODEL)), w(ks[5], (D_MODEL, D_MODEL)),
        w(ks[6], (D_MODEL, D_MODEL)), w(ks[7], (D_MODEL, D_MODEL)),
        # LN3 + feed-forward (linear_1 bias b1, linear_2 bias b2)
        ones, zeros,
        w(ks[8], (D_MODEL, D_FF)), jnp.zeros((1, D_FF), jnp.float32),
        w(ks[9], (D_FF, D_MODEL)), jnp.zeros((1, D_MODEL), jnp.float32),
    ]


if __name__ == "__main__":
    B, S_TGT, S_SRC = 2, 8, 16
    key = jax.random.PRNGKey(0)
    kx, ke, kp = jax.random.split(key, 3)

    x = jax.random.normal(kx, (B, S_TGT, D_MODEL), jnp.float32)
    enc = jax.random.normal(ke, (B, S_SRC, D_MODEL), jnp.float32)

    # causal decoder mask, broadcast over batch
    tgt_mask = jnp.tril(jnp.ones((S_TGT, S_TGT), jnp.float32))
    tgt_mask = jnp.broadcast_to(tgt_mask, (B, S_TGT, S_TGT))
    # encoder padding mask: batch 1 has its last 4 source tokens masked
    src_mask = jnp.ones((B, 1, S_SRC), jnp.float32)
    src_mask = src_mask.at[1, 0, S_SRC - 4:].set(0.0)

    params = init_params(kp)

    out = decoder_block(x, enc, src_mask, tgt_mask, params)
    out = jax.block_until_ready(out)

    ref = decoder_block_ref(x, enc, src_mask, tgt_mask, params)
    assert out.shape == (B, S_TGT, D_MODEL)
    # Exact softmax normalization; only the LN eps placement (rsqrt(var+eps)
    # vs (std+eps)) and f32 re-association differ from the reference.
    assert jnp.allclose(out, ref, atol=1e-3, rtol=1e-3), "mismatch vs JAX reference"

    print("KERNEL_OK")
</pallas_src>

<mosaic_0001>
module attributes {stable_mosaic.version = 11 : i64} {
  func.func @decoder_block_kernel(%arg0: memref<16x32xf32, #tpu.memory_space<vmem>>, %arg1: memref<32x32xf32, #tpu.memory_space<vmem>>, %arg2: memref<2x8x8xf32, #tpu.memory_space<vmem>>, %arg3: memref<2x1x16xf32, #tpu.memory_space<vmem>>, %arg4: memref<32x320xf32, #tpu.memory_space<vmem>>, %arg5: memref<64x32xf32, #tpu.memory_space<vmem>>, %arg6: memref<8x64xf32, #tpu.memory_space<vmem>>, %arg7: memref<16x32xf32, #tpu.memory_space<vmem>>) attributes {dimension_semantics = [], scalar_prefetch = 0 : i64, scratch_operands = 0 : i64, tpu.core_type = #tpu.core_type<tc>} {
    %c0 = arith.constant 0 : index
    %c0_0 = arith.constant 0 : index
    %0 = vector.load %arg0[%c0, %c0_0] : memref<16x32xf32, #tpu.memory_space<vmem>>, vector<16x32xf32>
    %c0_1 = arith.constant 0 : index
    %c0_2 = arith.constant 0 : index
    %1 = vector.load %arg1[%c0_1, %c0_2] : memref<32x32xf32, #tpu.memory_space<vmem>>, vector<32x32xf32>
    %c0_3 = arith.constant 0 : index
    %c0_4 = arith.constant 0 : index
    %2 = vector.load %arg4[%c0_3, %c0_4] : memref<32x320xf32, #tpu.memory_space<vmem>>, vector<32x320xf32>
    %c0_5 = arith.constant 0 : index
    %c0_6 = arith.constant 0 : index
    %3 = vector.load %arg6[%c0_5, %c0_6] : memref<8x64xf32, #tpu.memory_space<vmem>>, vector<8x64xf32>
    %4 = vector.extract_strided_slice %2 {offsets = [0, 0], sizes = [32, 96], strides = [1, 1]} : vector<32x320xf32> to vector<32x96xf32>
    %5 = vector.extract_strided_slice %2 {offsets = [0, 96], sizes = [32, 32], strides = [1, 1]} : vector<32x320xf32> to vector<32x32xf32>
    %6 = vector.extract_strided_slice %2 {offsets = [0, 128], sizes = [32, 64], strides = [1, 1]} : vector<32x320xf32> to vector<32x64xf32>
    %7 = vector.extract_strided_slice %2 {offsets = [0, 192], sizes = [32, 32], strides = [1, 1]} : vector<32x320xf32> to vector<32x32xf32>
    %8 = vector.extract_strided_slice %2 {offsets = [0, 224], sizes = [32, 32], strides = [1, 1]} : vector<32x320xf32> to vector<32x32xf32>
    %9 = vector.extract_strided_slice %2 {offsets = [0, 256], sizes = [32, 64], strides = [1, 1]} : vector<32x320xf32> to vector<32x64xf32>
    %c0_7 = arith.constant 0 : index
    %c0_8 = arith.constant 0 : index
    %10 = vector.load %arg5[%c0_7, %c0_8] : memref<64x32xf32, #tpu.memory_space<vmem>>, vector<64x32xf32>
    %11 = vector.extract_strided_slice %3 {offsets = [0, 0], sizes = [1, 32], strides = [1, 1]} : vector<8x64xf32> to vector<1x32xf32>
    %12 = vector.extract_strided_slice %3 {offsets = [1, 0], sizes = [1, 32], strides = [1, 1]} : vector<8x64xf32> to vector<1x32xf32>
    %13 = vector.extract_strided_slice %3 {offsets = [2, 0], sizes = [1, 32], strides = [1, 1]} : vector<8x64xf32> to vector<1x32xf32>
    %14 = vector.extract_strided_slice %3 {offsets = [3, 0], sizes = [1, 32], strides = [1, 1]} : vector<8x64xf32> to vector<1x32xf32>
    %15 = vector.extract_strided_slice %3 {offsets = [4, 0], sizes = [1, 32], strides = [1, 1]} : vector<8x64xf32> to vector<1x32xf32>
    %16 = vector.extract_strided_slice %3 {offsets = [5, 0], sizes = [1, 32], strides = [1, 1]} : vector<8x64xf32> to vector<1x32xf32>
    %17 = vector.extract_strided_slice %3 {offsets = [6, 0], sizes = [1, 64], strides = [1, 1]} : vector<8x64xf32> to vector<1x64xf32>
    %18 = vector.extract_strided_slice %3 {offsets = [7, 0], sizes = [1, 32], strides = [1, 1]} : vector<8x64xf32> to vector<1x32xf32>
    %c0_9 = arith.constant 0 : index
    %c0_10 = arith.constant 0 : index
    %c0_11 = arith.constant 0 : index
    %19 = vector.load %arg2[%c0_9, %c0_10, %c0_11] : memref<2x8x8xf32, #tpu.memory_space<vmem>>, vector<2x8x8xf32>
    %cst = arith.constant 5.000000e-01 : f32
    %20 = vector.broadcast %cst : f32 to vector<2x8x8xf32>
    %21 = arith.cmpf olt, %19, %20 : vector<2x8x8xf32>
    %cst_12 = arith.constant -1.000000e+09 : f32
    %cst_13 = arith.constant 0.000000e+00 : f32
    %22 = vector.broadcast %cst_12 : f32 to vector<2x8x8xf32>
    %23 = vector.broadcast %cst_13 : f32 to vector<2x8x8xf32>
    %24 = arith.select %21, %22, %23 : vector<2x8x8xi1>, vector<2x8x8xf32>
    %c0_14 = arith.constant 0 : index
    %c0_15 = arith.constant 0 : index
    %c0_16 = arith.constant 0 : index
    %25 = vector.load %arg3[%c0_14, %c0_15, %c0_16] : memref<2x1x16xf32, #tpu.memory_space<vmem>>, vector<2x1x16xf32>
    %cst_17 = arith.constant 5.000000e-01 : f32
    %26 = vector.broadcast %cst_17 : f32 to vector<2x1x16xf32>
    %27 = arith.cmpf olt, %25, %26 : vector<2x1x16xf32>
    %cst_18 = arith.constant -1.000000e+09 : f32
    %cst_19 = arith.constant 0.000000e+00 : f32
    %28 = vector.broadcast %cst_18 : f32 to vector<2x1x16xf32>
    %29 = vector.broadcast %cst_19 : f32 to vector<2x1x16xf32>
    %30 = arith.select %27, %28, %29 : vector<2x1x16xi1>, vector<2x1x16xf32>
    %cst_20 = arith.constant dense<0.000000e+00> : vector<16xf32>
    %31 = vector.multi_reduction <add>, %0, %cst_20 [1] : vector<16x32xf32> to vector<16xf32>
    %32 = vector.shape_cast %31 : vector<16xf32> to vector<16x1xf32>
    %cst_21 = arith.constant 3.200000e+01 : f32
    %33 = vector.broadcast %cst_21 : f32 to vector<16x1xf32>
    %34 = arith.divf %32, %33 : vector<16x1xf32>
    %35 = vector.broadcast %34 : vector<16x1xf32> to vector<16x32xf32>
    %36 = arith.subf %0, %35 : vector<16x32xf32>
    %37 = arith.mulf %36, %36 : vector<16x32xf32>
    %cst_22 = arith.constant dense<0.000000e+00> : vector<16xf32>
    %38 = vector.multi_reduction <add>, %37, %cst_22 [1] : vector<16x32xf32> to vector<16xf32>
    %39 = vector.shape_cast %38 : vector<16xf32> to vector<16x1xf32>
    %cst_23 = arith.constant 0.0322580636 : f32
    %40 = vector.broadcast %cst_23 : f32 to vector<16x1xf32>
    %41 = arith.mulf %39, %40 : vector<16x1xf32>
    %42 = vector.broadcast %34 : vector<16x1xf32> to vector<16x32xf32>
    %43 = arith.subf %0, %42 : vector<16x32xf32>
    %44 = vector.broadcast %11 : vector<1x32xf32> to vector<16x32xf32>
    %45 = arith.mulf %44, %43 : vector<16x32xf32>
    %cst_24 = arith.constant 9.99999997E-7 : f32
    %46 = vector.broadcast %cst_24 : f32 to vector<16x1xf32>
    %47 = arith.addf %41, %46 : vector<16x1xf32>
    %48 = math.rsqrt %47 : vector<16x1xf32>
    %49 = vector.broadcast %48 : vector<16x1xf32> to vector<16x32xf32>
    %50 = arith.mulf %45, %49 : vector<16x32xf32>
    %51 = vector.broadcast %12 : vector<1x32xf32> to vector<16x32xf32>
    %52 = arith.addf %50, %51 : vector<16x32xf32>
    %cst_25 = arith.constant dense<0.000000e+00> : vector<16x96xf32>
    %53 = tpu.matmul %52, %4, %cst_25 {dimension_numbers = #tpu.dot_dimension_numbers<[1], [0], [0], [1], [0, 0, 1, 1], [], []>} : vector<16x32xf32>, vector<32x96xf32>, vector<16x96xf32> -> vector<16x96xf32>
    %54 = vector.shape_cast %53 : vector<16x96xf32> to vector<2x8x96xf32>
    %55 = vector.extract_strided_slice %54 {offsets = [0, 0, 0], sizes = [2, 8, 8], strides = [1, 1, 1]} : vector<2x8x96xf32> to vector<2x8x8xf32>
    %56 = vector.extract_strided_slice %54 {offsets = [0, 0, 8], sizes = [2, 8, 8], strides = [1, 1, 1]} : vector<2x8x96xf32> to vector<2x8x8xf32>
    %57 = vector.extract_strided_slice %54 {offsets = [0, 0, 16], sizes = [2, 8, 8], strides = [1, 1, 1]} : vector<2x8x96xf32> to vector<2x8x8xf32>
    %58 = vector.extract_strided_slice %54 {offsets = [0, 0, 24], sizes = [2, 8, 8], strides = [1, 1, 1]} : vector<2x8x96xf32> to vector<2x8x8xf32>
    %59 = tpu.concatenate %55, %56, %57, %58 in 0 : vector<2x8x8xf32>, vector<2x8x8xf32>, vector<2x8x8xf32>, vector<2x8x8xf32> -> vector<8x8x8xf32>
    %60 = vector.extract_strided_slice %54 {offsets = [0, 0, 32], sizes = [2, 8, 8], strides = [1, 1, 1]} : vector<2x8x96xf32> to vector<2x8x8xf32>
    %61 = vector.extract_strided_slice %54 {offsets = [0, 0, 40], sizes = [2, 8, 8], strides = [1, 1, 1]} : vector<2x8x96xf32> to vector<2x8x8xf32>
    %62 = vector.extract_strided_slice %54 {offsets = [0, 0, 48], sizes = [2, 8, 8], strides = [1, 1, 1]} : vector<2x8x96xf32> to vector<2x8x8xf32>
    %63 = vector.extract_strided_slice %54 {offsets = [0, 0, 56], sizes = [2, 8, 8], strides = [1, 1, 1]} : vector<2x8x96xf32> to vector<2x8x8xf32>
    %64 = tpu.concatenate %60, %61, %62, %63 in 0 : vector<2x8x8xf32>, vector<2x8x8xf32>, vector<2x8x8xf32>, vector<2x8x8xf32> -> vector<8x8x8xf32>
    %65 = vector.extract_strided_slice %54 {offsets = [0, 0, 64], sizes = [2, 8, 8], strides = [1, 1, 1]} : vector<2x8x96xf32> to vector<2x8x8xf32>
    %66 = vector.extract_strided_slice %54 {offsets = [0, 0, 72], sizes = [2, 8, 8], strides = [1, 1, 1]} : vector<2x8x96xf32> to vector<2x8x8xf32>
    %67 = vector.extract_strided_slice %54 {offsets = [0, 0, 80], sizes = [2, 8, 8], strides = [1, 1, 1]} : vector<2x8x96xf32> to vector<2x8x8xf32>
    %68 = vector.extract_strided_slice %54 {offsets = [0, 0, 88], sizes = [2, 8, 8], strides = [1, 1, 1]} : vector<2x8x96xf32> to vector<2x8x8xf32>
    %69 = tpu.concatenate %65, %66, %67, %68 in 0 : vector<2x8x8xf32>, vector<2x8x8xf32>, vector<2x8x8xf32>, vector<2x8x8xf32> -> vector<8x8x8xf32>
    "tpu.trace_start"() <{level = 10 : i32, message = "bqd,bkd->bqk"}> : () -> ()
    %cst_26 = arith.constant dense<0.000000e+00> : vector<8x8x8xf32>
    %70 = tpu.matmul %59, %64, %cst_26 {dimension_numbers = #tpu.dot_dimension_numbers<[2], [2], [1], [1], [0, 0, 0, 1, 1, 1], [0], [0]>} : vector<8x8x8xf32>, vector<8x8x8xf32>, vector<8x8x8xf32> -> vector<8x8x8xf32>
    "tpu.trace_stop"() : () -> ()
    %71 = vector.shape_cast %70 : vector<8x8x8xf32> to vector<4x2x8x8xf32>
    %72 = vector.shape_cast %24 : vector<2x8x8xf32> to vector<1x2x8x8xf32>
    %73 = vector.broadcast %72 : vector<1x2x8x8xf32> to vector<4x2x8x8xf32>
    %74 = arith.addf %71, %73 : vector<4x2x8x8xf32>
    %cst_27 = arith.constant dense<0xFF800000> : vector<4x2x8xf32>
    %75 = vector.multi_reduction <maximumf>, %74, %cst_27 [3] : vector<4x2x8x8xf32> to vector<4x2x8xf32>
    %76 = vector.shape_cast %75 : vector<4x2x8xf32> to vector<4x2x8x1xf32>
    %77 = vector.broadcast %76 : vector<4x2x8x1xf32> to vector<4x2x8x8xf32>
    %78 = arith.subf %74, %77 : vector<4x2x8x8xf32>
    %79 = math.exp %78 : vector<4x2x8x8xf32>
    %cst_28 = arith.constant dense<0.000000e+00> : vector<4x2x8xf32>
    %80 = vector.multi_reduction <add>, %79, %cst_28 [3] : vector<4x2x8x8xf32> to vector<4x2x8xf32>
    %81 = vector.shape_cast %80 : vector<4x2x8xf32> to vector<4x2x8x1xf32>
    %82 = vector.broadcast %81 : vector<4x2x8x1xf32> to vector<4x2x8x8xf32>
    %83 = arith.divf %79, %82 : vector<4x2x8x8xf32>
    %84 = vector.shape_cast %83 : vector<4x2x8x8xf32> to vector<8x8x8xf32>
    "tpu.trace_start"() <{level = 10 : i32, message = "bqk,bkd->bqd"}> : () -> ()
    %cst_29 = arith.constant dense<0.000000e+00> : vector<8x8x8xf32>
    %85 = tpu.matmul %84, %69, %cst_29 {dimension_numbers = #tpu.dot_dimension_numbers<[2], [1], [1], [2], [0, 0, 0, 1, 1, 2], [0], [0]>} : vector<8x8x8xf32>, vector<8x8x8xf32>, vector<8x8x8xf32> -> vector<8x8x8xf32>
    "tpu.trace_stop"() : () -> ()
    %86 = vector.extract_strided_slice %85 {offsets = [0, 0, 0], sizes = [2, 8, 8], strides = [1, 1, 1]} : vector<8x8x8xf32> to vector<2x8x8xf32>
    %87 = vector.extract_strided_slice %85 {offsets = [2, 0, 0], sizes = [2, 8, 8], strides = [1, 1, 1]} : vector<8x8x8xf32> to vector<2x8x8xf32>
    %88 = vector.extract_strided_slice %85 {offsets = [4, 0, 0], sizes = [2, 8, 8], strides = [1, 1, 1]} : vector<8x8x8xf32> to vector<2x8x8xf32>
    %89 = vector.extract_strided_slice %85 {offsets = [6, 0, 0], sizes = [2, 8, 8], strides = [1, 1, 1]} : vector<8x8x8xf32> to vector<2x8x8xf32>
    %90 = tpu.concatenate %86, %87, %88, %89 in 2 : vector<2x8x8xf32>, vector<2x8x8xf32>, vector<2x8x8xf32>, vector<2x8x8xf32> -> vector<2x8x32xf32>
    %91 = vector.shape_cast %90 : vector<2x8x32xf32> to vector<16x32xf32>
    %cst_30 = arith.constant dense<0.000000e+00> : vector<16x32xf32>
    %92 = tpu.matmul %91, %7, %cst_30 {dimension_numbers = #tpu.dot_dimension_numbers<[1], [0], [0], [1], [0, 0, 1, 1], [], []>} : vector<16x32xf32>, vector<32x32xf32>, vector<16x32xf32> -> vector<16x32xf32>
    %93 = arith.addf %0, %92 : vector<16x32xf32>
    %cst_31 = arith.constant dense<0.000000e+00> : vector<16xf32>
    %94 = vector.multi_reduction <add>, %93, %cst_31 [1] : vector<16x32xf32> to vector<16xf32>
    %95 = vector.shape_cast %94 : vector<16xf32> to vector<16x1xf32>
    %cst_32 = arith.constant 3.200000e+01 : f32
    %96 = vector.broadcast %cst_32 : f32 to vector<16x1xf32>
    %97 = arith.divf %95, %96 : vector<16x1xf32>
    %98 = vector.broadcast %97 : vector<16x1xf32> to vector<16x32xf32>
    %99 = arith.subf %93, %98 : vector<16x32xf32>
    %100 = arith.mulf %99, %99 : vector<16x32xf32>
    %cst_33 = arith.constant dense<0.000000e+00> : vector<16xf32>
    %101 = vector.multi_reduction <add>, %100, %cst_33 [1] : vector<16x32xf32> to vector<16xf32>
    %102 = vector.shape_cast %101 : vector<16xf32> to vector<16x1xf32>
    %cst_34 = arith.constant 0.0322580636 : f32
    %103 = vector.broadcast %cst_34 : f32 to vector<16x1xf32>
    %104 = arith.mulf %102, %103 : vector<16x1xf32>
    %105 = vector.broadcast %97 : vector<16x1xf32> to vector<16x32xf32>
    %106 = arith.subf %93, %105 : vector<16x32xf32>
    %107 = vector.broadcast %13 : vector<1x32xf32> to vector<16x32xf32>
    %108 = arith.mulf %107, %106 : vector<16x32xf32>
    %cst_35 = arith.constant 9.99999997E-7 : f32
    %109 = vector.broadcast %cst_35 : f32 to vector<16x1xf32>
    %110 = arith.addf %104, %109 : vector<16x1xf32>
    %111 = math.rsqrt %110 : vector<16x1xf32>
    %112 = vector.broadcast %111 : vector<16x1xf32> to vector<16x32xf32>
    %113 = arith.mulf %108, %112 : vector<16x32xf32>
    %114 = vector.broadcast %14 : vector<1x32xf32> to vector<16x32xf32>
    %115 = arith.addf %113, %114 : vector<16x32xf32>
    %cst_36 = arith.constant dense<0.000000e+00> : vector<16x32xf32>
    %116 = tpu.matmul %115, %5, %cst_36 {dimension_numbers = #tpu.dot_dimension_numbers<[1], [0], [0], [1], [0, 0, 1, 1], [], []>} : vector<16x32xf32>, vector<32x32xf32>, vector<16x32xf32> -> vector<16x32xf32>
    %117 = vector.shape_cast %116 : vector<16x32xf32> to vector<2x8x32xf32>
    %cst_37 = arith.constant dense<0.000000e+00> : vector<32x64xf32>
    %118 = tpu.matmul %1, %6, %cst_37 {dimension_numbers = #tpu.dot_dimension_numbers<[1], [0], [0], [1], [0, 0, 1, 1], [], []>} : vector<32x32xf32>, vector<32x64xf32>, vector<32x64xf32> -> vector<32x64xf32>
    %119 = vector.shape_cast %118 : vector<32x64xf32> to vector<2x16x64xf32>
    %120 = vector.extract_strided_slice %117 {offsets = [0, 0, 0], sizes = [2, 8, 8], strides = [1, 1, 1]} : vector<2x8x32xf32> to vector<2x8x8xf32>
    %121 = vector.extract_strided_slice %117 {offsets = [0, 0, 8], sizes = [2, 8, 8], strides = [1, 1, 1]} : vector<2x8x32xf32> to vector<2x8x8xf32>
    %122 = vector.extract_strided_slice %117 {offsets = [0, 0, 16], sizes = [2, 8, 8], strides = [1, 1, 1]} : vector<2x8x32xf32> to vector<2x8x8xf32>
    %123 = vector.extract_strided_slice %117 {offsets = [0, 0, 24], sizes = [2, 8, 8], strides = [1, 1, 1]} : vector<2x8x32xf32> to vector<2x8x8xf32>
    %124 = tpu.concatenate %120, %121, %122, %123 in 0 : vector<2x8x8xf32>, vector<2x8x8xf32>, vector<2x8x8xf32>, vector<2x8x8xf32> -> vector<8x8x8xf32>
    %125 = vector.extract_strided_slice %119 {offsets = [0, 0, 0], sizes = [2, 16, 8], strides = [1, 1, 1]} : vector<2x16x64xf32> to vector<2x16x8xf32>
    %126 = vector.extract_strided_slice %119 {offsets = [0, 0, 8], sizes = [2, 16, 8], strides = [1, 1, 1]} : vector<2x16x64xf32> to vector<2x16x8xf32>
    %127 = vector.extract_strided_slice %119 {offsets = [0, 0, 16], sizes = [2, 16, 8], strides = [1, 1, 1]} : vector<2x16x64xf32> to vector<2x16x8xf32>
    %128 = vector.extract_strided_slice %119 {offsets = [0, 0, 24], sizes = [2, 16, 8], strides = [1, 1, 1]} : vector<2x16x64xf32> to vector<2x16x8xf32>
    %129 = tpu.concatenate %125, %126, %127, %128 in 0 : vector<2x16x8xf32>, vector<2x16x8xf32>, vector<2x16x8xf32>, vector<2x16x8xf32> -> vector<8x16x8xf32>
    %130 = vector.extract_strided_slice %119 {offsets = [0, 0, 32], sizes = [2, 16, 8], strides = [1, 1, 1]} : vector<2x16x64xf32> to vector<2x16x8xf32>
    %131 = vector.extract_strided_slice %119 {offsets = [0, 0, 40], sizes = [2, 16, 8], strides = [1, 1, 1]} : vector<2x16x64xf32> to vector<2x16x8xf32>
    %132 = vector.extract_strided_slice %119 {offsets = [0, 0, 48], sizes = [2, 16, 8], strides = [1, 1, 1]} : vector<2x16x64xf32> to vector<2x16x8xf32>
    %133 = vector.extract_strided_slice %119 {offsets = [0, 0, 56], sizes = [2, 16, 8], strides = [1, 1, 1]} : vector<2x16x64xf32> to vector<2x16x8xf32>
    %134 = tpu.concatenate %130, %131, %132, %133 in 0 : vector<2x16x8xf32>, vector<2x16x8xf32>, vector<2x16x8xf32>, vector<2x16x8xf32> -> vector<8x16x8xf32>
    "tpu.trace_start"() <{level = 10 : i32, message = "bqd,bkd->bqk"}> : () -> ()
    %cst_38 = arith.constant dense<0.000000e+00> : vector<8x8x16xf32>
    %135 = tpu.matmul %124, %129, %cst_38 {dimension_numbers = #tpu.dot_dimension_numbers<[2], [2], [1], [1], [0, 0, 0, 1, 1, 1], [0], [0]>} : vector<8x8x8xf32>, vector<8x16x8xf32>, vector<8x8x16xf32> -> vector<8x8x16xf32>
    "tpu.trace_stop"() : () -> ()
    %136 = vector.shape_cast %135 : vector<8x8x16xf32> to vector<4x2x8x16xf32>
    %137 = vector.shape_cast %30 : vector<2x1x16xf32> to vector<1x2x1x16xf32>
    %138 = vector.broadcast %137 : vector<1x2x1x16xf32> to vector<4x2x8x16xf32>
    %139 = arith.addf %136, %138 : vector<4x2x8x16xf32>
    %cst_39 = arith.constant dense<0xFF800000> : vector<4x2x8xf32>
    %140 = vector.multi_reduction <maximumf>, %139, %cst_39 [3] : vector<4x2x8x16xf32> to vector<4x2x8xf32>
    %141 = vector.shape_cast %140 : vector<4x2x8xf32> to vector<4x2x8x1xf32>
    %142 = vector.broadcast %141 : vector<4x2x8x1xf32> to vector<4x2x8x16xf32>
    %143 = arith.subf %139, %142 : vector<4x2x8x16xf32>
    %144 = math.exp %143 : vector<4x2x8x16xf32>
    %cst_40 = arith.constant dense<0.000000e+00> : vector<4x2x8xf32>
    %145 = vector.multi_reduction <add>, %144, %cst_40 [3] : vector<4x2x8x16xf32> to vector<4x2x8xf32>
    %146 = vector.shape_cast %145 : vector<4x2x8xf32> to vector<4x2x8x1xf32>
    %147 = vector.broadcast %146 : vector<4x2x8x1xf32> to vector<4x2x8x16xf32>
    %148 = arith.divf %144, %147 : vector<4x2x8x16xf32>
    %149 = vector.shape_cast %148 : vector<4x2x8x16xf32> to vector<8x8x16xf32>
    "tpu.trace_start"() <{level = 10 : i32, message = "bqk,bkd->bqd"}> : () -> ()
    %cst_41 = arith.constant dense<0.000000e+00> : vector<8x8x8xf32>
    %150 = tpu.matmul %149, %134, %cst_41 {dimension_numbers = #tpu.dot_dimension_numbers<[2], [1], [1], [2], [0, 0, 0, 1, 1, 2], [0], [0]>} : vector<8x8x16xf32>, vector<8x16x8xf32>, vector<8x8x8xf32> -> vector<8x8x8xf32>
    "tpu.trace_stop"() : () -> ()
    %151 = vector.extract_strided_slice %150 {offsets = [0, 0, 0], sizes = [2, 8, 8], strides = [1, 1, 1]} : vector<8x8x8xf32> to vector<2x8x8xf32>
    %152 = vector.extract_strided_slice %150 {offsets = [2, 0, 0], sizes = [2, 8, 8], strides = [1, 1, 1]} : vector<8x8x8xf32> to vector<2x8x8xf32>
    %153 = vector.extract_strided_slice %150 {offsets = [4, 0, 0], sizes = [2, 8, 8], strides = [1, 1, 1]} : vector<8x8x8xf32> to vector<2x8x8xf32>
    %154 = vector.extract_strided_slice %150 {offsets = [6, 0, 0], sizes = [2, 8, 8], strides = [1, 1, 1]} : vector<8x8x8xf32> to vector<2x8x8xf32>
    %155 = tpu.concatenate %151, %152, %153, %154 in 2 : vector<2x8x8xf32>, vector<2x8x8xf32>, vector<2x8x8xf32>, vector<2x8x8xf32> -> vector<2x8x32xf32>
    %156 = vector.shape_cast %155 : vector<2x8x32xf32> to vector<16x32xf32>
    %cst_42 = arith.constant dense<0.000000e+00> : vector<16x32xf32>
    %157 = tpu.matmul %156, %8, %cst_42 {dimension_numbers = #tpu.dot_dimension_numbers<[1], [0], [0], [1], [0, 0, 1, 1], [], []>} : vector<16x32xf32>, vector<32x32xf32>, vector<16x32xf32> -> vector<16x32xf32>
    %158 = arith.addf %93, %157 : vector<16x32xf32>
    %cst_43 = arith.constant dense<0.000000e+00> : vector<16xf32>
    %159 = vector.multi_reduction <add>, %158, %cst_43 [1] : vector<16x32xf32> to vector<16xf32>
    %160 = vector.shape_cast %159 : vector<16xf32> to vector<16x1xf32>
    %cst_44 = arith.constant 3.200000e+01 : f32
    %161 = vector.broadcast %cst_44 : f32 to vector<16x1xf32>
    %162 = arith.divf %160, %161 : vector<16x1xf32>
    %163 = vector.broadcast %162 : vector<16x1xf32> to vector<16x32xf32>
    %164 = arith.subf %158, %163 : vector<16x32xf32>
    %165 = arith.mulf %164, %164 : vector<16x32xf32>
    %cst_45 = arith.constant dense<0.000000e+00> : vector<16xf32>
    %166 = vector.multi_reduction <add>, %165, %cst_45 [1] : vector<16x32xf32> to vector<16xf32>
    %167 = vector.shape_cast %166 : vector<16xf32> to vector<16x1xf32>
    %cst_46 = arith.constant 0.0322580636 : f32
    %168 = vector.broadcast %cst_46 : f32 to vector<16x1xf32>
    %169 = arith.mulf %167, %168 : vector<16x1xf32>
    %170 = vector.broadcast %162 : vector<16x1xf32> to vector<16x32xf32>
    %171 = arith.subf %158, %170 : vector<16x32xf32>
    %172 = vector.broadcast %15 : vector<1x32xf32> to vector<16x32xf32>
    %173 = arith.mulf %172, %171 : vector<16x32xf32>
    %cst_47 = arith.constant 9.99999997E-7 : f32
    %174 = vector.broadcast %cst_47 : f32 to vector<16x1xf32>
    %175 = arith.addf %169, %174 : vector<16x1xf32>
    %176 = math.rsqrt %175 : vector<16x1xf32>
    %177 = vector.broadcast %176 : vector<16x1xf32> to vector<16x32xf32>
    %178 = arith.mulf %173, %177 : vector<16x32xf32>
    %179 = vector.broadcast %16 : vector<1x32xf32> to vector<16x32xf32>
    %180 = arith.addf %178, %179 : vector<16x32xf32>
    %cst_48 = arith.constant dense<0.000000e+00> : vector<16x64xf32>
    %181 = tpu.matmul %180, %9, %cst_48 {dimension_numbers = #tpu.dot_dimension_numbers<[1], [0], [0], [1], [0, 0, 1, 1], [], []>} : vector<16x32xf32>, vector<32x64xf32>, vector<16x64xf32> -> vector<16x64xf32>
    %182 = vector.broadcast %17 : vector<1x64xf32> to vector<16x64xf32>
    %183 = arith.addf %181, %182 : vector<16x64xf32>
    %cst_49 = arith.constant 0.000000e+00 : f32
    %184 = vector.broadcast %cst_49 : f32 to vector<16x64xf32>
    %185 = arith.maximumf %183, %184 : vector<16x64xf32>
    %cst_50 = arith.constant dense<0.000000e+00> : vector<16x32xf32>
    %186 = tpu.matmul %185, %10, %cst_50 {dimension_numbers = #tpu.dot_dimension_numbers<[1], [0], [0], [1], [0, 0, 1, 1], [], []>} : vector<16x64xf32>, vector<64x32xf32>, vector<16x32xf32> -> vector<16x32xf32>
    %187 = vector.broadcast %18 : vector<1x32xf32> to vector<16x32xf32>
    %188 = arith.addf %186, %187 : vector<16x32xf32>
    %189 = arith.addf %158, %188 : vector<16x32xf32>
    %c0_51 = arith.constant 0 : index
    %c0_52 = arith.constant 0 : index
    %190 = vector.load %arg7[%c0_51, %c0_52] : memref<16x32xf32, #tpu.memory_space<vmem>>, vector<16x32xf32>
    tpu.vector_store %arg7[%c0_51, %c0_52], %189 {strides = array<i32>} : memref<16x32xf32, #tpu.memory_space<vmem>>, vector<16x32xf32>,
    return
  }
}

</mosaic_0001>

<llo_original>
// kernel: tpu_custom_call.1
$region0: #{tpu_custom_call.1}
  #allocation0 [shape = 'u32[]', space=smem, size = 0x4, offset = 0x4, fixed_abs, tag = 'smem constant byte address 0x4 - core index']
  #allocation1 [shape = 'u32[72,128]{1,0:T(1,128)}', space=vmem, size = 0x9000, scoped, tag = 'internal scratch']
  %s0 = inlined_call_operand.hbm [shape: f32[16,32], index: 0, kind: input, shape index: {}]
  %s1 = inlined_call_operand.hbm [shape: f32[32,32], index: 1, kind: input, shape index: {}]
  %s2 = inlined_call_operand.hbm [shape: f32[2,8,8], index: 2, kind: input, shape index: {}]
  %s3 = inlined_call_operand.vmem [shape: f32[2,1,16], index: 3, kind: input, shape index: {}]
  %s4 = inlined_call_operand.vmem [shape: f32[32,320], index: 4, kind: input, shape index: {}]
  %s5 = inlined_call_operand.vmem [shape: f32[64,32], index: 5, kind: input, shape index: {}]
  %s6 = inlined_call_operand.hbm [shape: f32[8,64], index: 6, kind: input, shape index: {}]
  %s7 = inlined_call_operand.hbm [shape: f32[16,32], index: 7, kind: output, shape index: {}]
  %s8 = sld [smem:[#allocation0]]
  $region54: #{tpu_custom_call.1} parent=0
    _
  %s10 = ssub.s32 1, %s8
  %s11 = scalar_select 0, %s10, %s8
  $region1: #{tpu_custom_call.1} parent=0
    #allocation2 [shape = 'u8[8192]{0}', space=vmem, size = 0x2000, scoped, tag = 'input window, operand 0, single buffered']
    #allocation3 [shape = 's32[1]{0}', space=sflag, size = 0x4, scoped, tag = 'scoped memory for tpu_custom_call.1']
    #allocation4 [shape = 's32[1]{0}', space=sflag, size = 0x4, scoped, tag = 'scoped memory for tpu_custom_call.1']
    #allocation5 [shape = 'u8[16384]{0}', space=vmem, size = 0x4000, scoped, tag = 'input window, operand 1, single buffered']
    #allocation6 [shape = 's32[1]{0}', space=sflag, size = 0x4, scoped, tag = 'scoped memory for tpu_custom_call.1']
    #allocation7 [shape = 'u8[8192]{0}', space=vmem, size = 0x2000, scoped, tag = 'input window, operand 2, single buffered']
    #allocation8 [shape = 'u8[4096]{0}', space=vmem, size = 0x1000, scoped, tag = 'input window, operand 6, single buffered']
    #allocation9 [shape = 's32[1]{0}', space=sflag, size = 0x4, scoped, tag = 'scoped memory for tpu_custom_call.1']
    #allocation10 [shape = 'u8[8192]{0}', space=vmem, size = 0x2000, scoped, tag = 'output window, operand 0, single buffered']
    %12 = vsyncpa [#allocation3], 0
    %13 = vsyncpa [#allocation6], 0
    %14 = vsyncpa [#allocation9], 0
    %15 = vsyncpa [#allocation4], 0
    // Predicated region
    $region2: #{tpu_custom_call.1} parent=1 // pred_check
      _
    $region3: #{tpu_custom_call.1} parent=1 // pred_check_branch
      %17 = sbr.rel (0) target = $region5
    $region4: #{tpu_custom_call.1} parent=1 // pred_region
      %19 = vsyncadd [#allocation3], 0
      %s20 = sshll.u32 %s0, 4
      %s21 = int_to_ptr.hbm [resolvable:$true] %s20
      %s22 = sshll.u32 [#allocation2], 4
      %s23 = int_to_ptr.vmem [resolvable:$true] %s22
      %28 = dma.hbm_to_vmem [thread:$0]  %s21, 256, %s23, [#allocation3], 128, 128, 8
    $region5: #{tpu_custom_call.1} parent=1 // pred_fallthru
      _
    // Predicated region
    $region6: #{tpu_custom_call.1} parent=1 // pred_check
      _
    $region7: #{tpu_custom_call.1} parent=1 // pred_check_branch
      %30 = sbr.rel (0) target = $region9
    $region8: #{tpu_custom_call.1} parent=1 // pred_region
      %32 = vsyncadd [#allocation6], 0
      %s33 = sshll.u32 %s1, 4
      %s34 = int_to_ptr.hbm [resolvable:$true] %s33
      %s35 = sshll.u32 [#allocation5], 4
      %s36 = int_to_ptr.vmem [resolvable:$true] %s35
      %41 = dma.hbm_to_vmem [thread:$0]  %s34, 512, %s36, [#allocation6], 128, 128, 8
    $region9: #{tpu_custom_call.1} parent=1 // pred_fallthru
      _
    // Predicated region
    $region10: #{tpu_custom_call.1} parent=1 // pred_check
      _
    $region11: #{tpu_custom_call.1} parent=1 // pred_check_branch
      %43 = sbr.rel (0) target = $region13
    $region12: #{tpu_custom_call.1} parent=1 // pred_region
      %45 = vsyncadd [#allocation6], 0
      %s46 = sshll.u32 %s2, 4
      %s47 = int_to_ptr.hbm [resolvable:$true] %s46
      %s48 = sshll.u32 [#allocation7], 4
      %s49 = int_to_ptr.vmem [resolvable:$true] %s48
      %54 = dma.hbm_to_vmem [thread:$0]  %s47, 256, %s49, [#allocation6], 128, 128, 8
    $region13: #{tpu_custom_call.1} parent=1 // pred_fallthru
      _
    // Predicated region
    $region14: #{tpu_custom_call.1} parent=1 // pred_check
      _
    $region15: #{tpu_custom_call.1} parent=1 // pred_check_branch
      %56 = sbr.rel (0) target = $region17
    $region16: #{tpu_custom_call.1} parent=1 // pred_region
      _
    $region17: #{tpu_custom_call.1} parent=1 // pred_fallthru
      _
    // Predicated region
    $region18: #{tpu_custom_call.1} parent=1 // pred_check
      _
    $region19: #{tpu_custom_call.1} parent=1 // pred_check_branch
      %58 = sbr.rel (0) target = $region21
    $region20: #{tpu_custom_call.1} parent=1 // pred_region
      _
    $region21: #{tpu_custom_call.1} parent=1 // pred_fallthru
      _
    // Predicated region
    $region22: #{tpu_custom_call.1} parent=1 // pred_check
      _
    $region23: #{tpu_custom_call.1} parent=1 // pred_check_branch
      %60 = sbr.rel (0) target = $region25
    $region24: #{tpu_custom_call.1} parent=1 // pred_region
      _
    $region25: #{tpu_custom_call.1} parent=1 // pred_fallthru
      _
    // Predicated region
    $region26: #{tpu_custom_call.1} parent=1 // pred_check
      _
    $region27: #{tpu_custom_call.1} parent=1 // pred_check_branch
      %62 = sbr.rel (0) target = $region29
    $region28: #{tpu_custom_call.1} parent=1 // pred_region
      %64 = vsyncadd [#allocation9], 0
      %s66 = sshll.u32 %s6, 4
      %s67 = int_to_ptr.hbm [resolvable:$true] %s66
      %s68 = sshll.u32 [#allocation8], 4
      %s69 = int_to_ptr.vmem [resolvable:$true] %s68
      %71 = dma.hbm_to_vmem [thread:$0]  %s67, 128, %s69, [#allocation9]
    $region29: #{tpu_custom_call.1} parent=1 // pred_fallthru
      _
    // Predicated region
    $region30: #{tpu_custom_call.1} parent=1 // pred_check
      _
    $region31: #{tpu_custom_call.1} parent=1 // pred_check_branch
      %73 = sbr.rel (0) target = $region33
    $region32: #{tpu_custom_call.1} parent=1 // pred_region
      %75 = dma.done [#allocation3], 256
    $region33: #{tpu_custom_call.1} parent=1 // pred_fallthru
      _
    // Predicated region
    $region34: #{tpu_custom_call.1} parent=1 // pred_check
      _
    $region35: #{tpu_custom_call.1} parent=1 // pred_check_branch
      %77 = sbr.rel (0) target = $region37
    $region36: #{tpu_custom_call.1} parent=1 // pred_region
      %79 = dma.done [#allocation6], 512
    $region37: #{tpu_custom_call.1} parent=1 // pred_fallthru
      _
    // Predicated region
    $region38: #{tpu_custom_call.1} parent=1 // pred_check
      _
    $region39: #{tpu_custom_call.1} parent=1 // pred_check_branch
      %81 = sbr.rel (0) target = $region41
    $region40: #{tpu_custom_call.1} parent=1 // pred_region
      %83 = dma.done [#allocation6], 256
    $region41: #{tpu_custom_call.1} parent=1 // pred_fallthru
      _
    // Predicated region
    $region42: #{tpu_custom_call.1} parent=1 // pred_check
      _
    $region43: #{tpu_custom_call.1} parent=1 // pred_check_branch
      %85 = sbr.rel (0) target = $region45
    $region44: #{tpu_custom_call.1} parent=1 // pred_region
      %87 = dma.done [#allocation9], 128
    $region45: #{tpu_custom_call.1} parent=1 // pred_fallthru
      _
    %v88 = vld [vmem:[#allocation2] sm:$0xff]
    %v89 = vld [vmem:[#allocation2 + $0x8] sm:$0xff]
    %v90 = vld [vmem:[#allocation5] sm:$0xff]
    %v91 = vld [vmem:[#allocation5 + $0x8] sm:$0xff]
    %v92 = vld [vmem:[#allocation5 + $0x10] sm:$0xff]
    %v93 = vld [vmem:[#allocation5 + $0x18] sm:$0xff]
    %v94 = vld [vmem:[%s4] sm:$0xff]
    %v95 = vld [vmem:[%s4 + $0x8] sm:$0xff]
    %v96 = vld [vmem:[%s4 + $0x10] sm:$0xff]
    %v97 = vld [vmem:[%s4 + $0x18] sm:$0xff]
    %v98 = vld [vmem:[%s4 + $0x20] sm:$0xff]
    %v99 = vld [vmem:[%s4 + $0x28] sm:$0xff]
    %v100 = vld [vmem:[%s4 + $0x30] sm:$0xff]
    %v101 = vld [vmem:[%s4 + $0x38] sm:$0xff]
    %v102 = vld [vmem:[%s4 + $0x40] sm:$0xff]
    %v103 = vld [vmem:[%s4 + $0x48] sm:$0xff]
    %v104 = vld [vmem:[%s4 + $0x50] sm:$0xff]
    %v105 = vld [vmem:[%s4 + $0x58] sm:$0xff]
    %v106 = vld [vmem:[#allocation8] sm:$0xff]
    %v107 = vld [vmem:[%s5] sm:$0xff]
    %v108 = vld [vmem:[%s5 + $0x8] sm:$0xff]
    %v109 = vld [vmem:[%s5 + $0x10] sm:$0xff]
    %v110 = vld [vmem:[%s5 + $0x18] sm:$0xff]
    %v111 = vld [vmem:[%s5 + $0x20] sm:$0xff]
    %v112 = vld [vmem:[%s5 + $0x28] sm:$0xff]
    %v113 = vld [vmem:[%s5 + $0x30] sm:$0xff]
    %v114 = vld [vmem:[%s5 + $0x38] sm:$0xff]
    %v115 = vld [vmem:[#allocation7] sm:$0xff]
    %v116 = vld [vmem:[#allocation7 + $0x8] sm:$0xff]
    %vm117 = vcmp.lt.f32.partialorder %v115, 0.5
    %vm118 = vcmp.lt.f32.partialorder %v116, 0.5
    %v119 = vsel %vm117, -1e+09, 0.0
    %v120 = vsel %vm118, -1e+09, 0.0
    %v121 = vld [vmem:[%s3] sm:$0x1]
    %v122 = vld [vmem:[%s3 + $0x1] sm:$0x1]
    %vm123 = vcmp.lt.f32.partialorder %v121, 0.5
    %vm124 = vcmp.lt.f32.partialorder %v122, 0.5
    %v125 = vsel %vm123, -1e+09, 0.0
    %v126 = vsel %vm124, -1e+09, 0.0
    %vm127 = vcmask 261120
    %v128 = vsel %vm127, %v88, 0.0
    %129 = vadd.xlane.f32.xlu0 %v128
    %v130 = vpop.xlane.xlu0 %129
    %v131 = vsel %vm127, %v89, 0.0
    %132 = vadd.xlane.f32.xlu0 %v131
    %v133 = vpop.xlane.xlu0 %132
    %v134 = vrcp.pop 32.0
    %v135 = vmul.f32 32.0, %v134
    %v136 = vsub.f32 1.0, %v135
    %v137 = vmul.f32 %v134, %v136
    %v138 = vadd.f32 %v134, %v137
    %vm139 = vweird.f32 %v134
    %v140 = vsel %vm139, %v134, %v138
    %v141 = vmul.f32 %v130, %v140
    %v142 = vmul.f32 %v133, %v140
    %v143 = vsub.f32 %v88, %v141
    %v144 = vsub.f32 %v89, %v142
    %v145 = vmul.f32 %v143, %v143
    %v146 = vmul.f32 %v144, %v144
    %v147 = vsel %vm127, %v145, 0.0
    %148 = vadd.xlane.f32.xlu0 %v147
    %v149 = vpop.xlane.xlu0 %148
    %v150 = vsel %vm127, %v146, 0.0
    %151 = vadd.xlane.f32.xlu0 %v150
    %v152 = vpop.xlane.xlu0 %151
    %v153 = vmul.f32 %v149, 0.032258064
    %v154 = vmul.f32 %v152, 0.032258064
    %v155 = vperm.slane %v106, 0
    %v156 = vmul.f32 %v155, %v143
    %v157 = vmul.f32 %v155, %v144
    %v158 = vadd.f32 %v153, 1e-06
    %v159 = vadd.f32 %v154, 1e-06
    %v160 = vrsqrt.pop %v158
    %v161 = vmul.f32 %v160, %v158
    %v162 = vmul.f32 %v161, %v160
    %v163 = vmul.f32 0.5, %v162
    %v164 = vsub.f32 1.5, %v163
    %v165 = vmul.f32 %v160, %v164
    %vm166 = vweird.f32 %v158
    %vm167 = vweird.f32 %v160
    %vm168 = vmor %vm166, %vm167
    %v169 = vsel %vm168, %v160, %v165
    %v170 = vrsqrt.pop %v159
    %v171 = vmul.f32 %v170, %v159
    %v172 = vmul.f32 %v171, %v170
    %v173 = vmul.f32 0.5, %v172
    %v174 = vsub.f32 1.5, %v173
    %v175 = vmul.f32 %v170, %v174
    %vm176 = vweird.f32 %v159
    %vm177 = vweird.f32 %v170
    %vm178 = vmor %vm176, %vm177
    %v179 = vsel %vm178, %v170, %v175
    %v180 = vmul.f32 %v156, %v169
    %v181 = vmul.f32 %v157, %v179
    %v182 = vperm.slane %v106, 1
    %v183 = vadd.f32 %v180, %v182
    %v184 = vadd.f32 %v181, %v182
    %v186 = vsel %vm127, %v183, 0
    %v189 = vsel %vm127, %v184, 0
    %191 = vmatpush.msra.mxu0 0.0
    %192 = vmatpush.msra.mxu0 0.0
    %193 = vmatpush.msra.mxu0 0.0
    %194 = vmatpush.msra.mxu0 0.0
    %195 = vmatpush.msra.mxu0 0.0
    %196 = vmatpush.msra.mxu0 0.0
    %197 = vmatpush.msra.mxu0 0.0
    %198 = vmatpush.msra.mxu0 0.0
    %199 = vmatpush.msra.mxu0 0.0
    %200 = vmatpush.msra.mxu0 0.0
    %201 = vmatpush.msra.mxu0 0.0
    %202 = vmatpush.msra.mxu0 0.0
    %203 = vmatpush.msra.mxu0 %v103
    %204 = vmatpush.msra.mxu0 %v100
    %205 = vmatpush.msra.mxu0 %v97
    %206 = vmatpush.msra.mxu0 %v94
    %207 = vmatmul.f32.gmra.mxu0 %v186
    %v208 = vpop.f32.mrf.mxu0
    %v209 = vadd.f32 0.0, %v208
    %210 = vmatmul.f32.gmra.mxu0 %v189
    %v211 = vpop.f32.mrf.mxu0
    %v212 = vadd.f32 0.0, %v211
    %213 = vdwg.mxu0
    %216 = vrot.lane.b32.xlu0 %v209, 120
    %v217 = vpop.permute.xlu0 %216
    %218 = vrot.lane.b32.xlu0 %v212, 120
    %v219 = vpop.permute.xlu0 %218
    %220 = vrot.lane.b32.xlu0 %v209, 112
    %v221 = vpop.permute.xlu0 %220
    %222 = vrot.lane.b32.xlu0 %v212, 112
    %v223 = vpop.permute.xlu0 %222
    %224 = vrot.lane.b32.xlu0 %v209, 104
    %v225 = vpop.permute.xlu0 %224
    %226 = vrot.lane.b32.xlu0 %v212, 104
    %v227 = vpop.permute.xlu0 %226
    %228 = vrot.lane.b32.xlu0 %v209, 96
    %v229 = vpop.permute.xlu0 %228
    %vm230 = vcmask 64512
    %v231 = vsel %vm230, %v209, 0
    %v233 = vsel %vm230, %v229, 0
    %235 = vmatpush.xpose.msra.mxu0 0.0
    %236 = vmatpush.xpose.msra.mxu0 0.0
    %237 = vmatpush.xpose.msra.mxu0 0.0
    %238 = vmatpush.xpose.msra.mxu0 0.0
    %239 = vmatpush.xpose.msra.mxu0 0.0
    %240 = vmatpush.xpose.msra.mxu0 0.0
    %241 = vmatpush.xpose.msra.mxu0 0.0
    %242 = vmatpush.xpose.msra.mxu0 0.0
    %243 = vmatpush.xpose.msra.mxu0 0.0
    %244 = vmatpush.xpose.msra.mxu0 0.0
    %245 = vmatpush.xpose.msra.mxu0 0.0
    %246 = vmatpush.xpose.msra.mxu0 0.0
    %247 = vmatpush.xpose.msra.mxu0 0.0
    %248 = vmatpush.xpose.msra.mxu0 0.0
    %249 = vmatpush.xpose.msra.mxu0 0.0
    %250 = vmatpush.xpose.msra.mxu0 %v233
    %251 = vmatmul.f32.gmra.mxu0 %v231
    %v252 = vpop.f32.mrf.mxu0
    %v253 = vadd.f32 0.0, %v252
    %254 = vdwg.mxu0
    %255 = vrot.lane.b32.xlu0 %v212, 96
    %v256 = vpop.permute.xlu0 %255
    %v257 = vsel %vm230, %v212, 0
    %v259 = vsel %vm230, %v256, 0
    %261 = vmatpush.xpose.msra.mxu0 0.0
    %262 = vmatpush.xpose.msra.mxu0 0.0
    %263 = vmatpush.xpose.msra.mxu0 0.0
    %264 = vmatpush.xpose.msra.mxu0 0.0
    %265 = vmatpush.xpose.msra.mxu0 0.0
    %266 = vmatpush.xpose.msra.mxu0 0.0
    %267 = vmatpush.xpose.msra.mxu0 0.0
    %268 = vmatpush.xpose.msra.mxu0 0.0
    %269 = vmatpush.xpose.msra.mxu0 0.0
    %270 = vmatpush.xpose.msra.mxu0 0.0
    %271 = vmatpush.xpose.msra.mxu0 0.0
    %272 = vmatpush.xpose.msra.mxu0 0.0
    %273 = vmatpush.xpose.msra.mxu0 0.0
    %274 = vmatpush.xpose.msra.mxu0 0.0
    %275 = vmatpush.xpose.msra.mxu0 0.0
    %276 = vmatpush.xpose.msra.mxu0 %v259
    %277 = vmatmul.f32.gmra.mxu0 %v257
    %v278 = vpop.f32.mrf.mxu0
    %v279 = vadd.f32 0.0, %v278
    %280 = vdwg.mxu0
    %281 = vrot.lane.b32.xlu0 %v217, 96
    %v282 = vpop.permute.xlu0 %281
    %v283 = vsel %vm230, %v217, 0
    %v285 = vsel %vm230, %v282, 0
    %287 = vmatpush.xpose.msra.mxu0 0.0
    %288 = vmatpush.xpose.msra.mxu0 0.0
    %289 = vmatpush.xpose.msra.mxu0 0.0
    %290 = vmatpush.xpose.msra.mxu0 0.0
    %291 = vmatpush.xpose.msra.mxu0 0.0
    %292 = vmatpush.xpose.msra.mxu0 0.0
    %293 = vmatpush.xpose.msra.mxu0 0.0
    %294 = vmatpush.xpose.msra.mxu0 0.0
    %295 = vmatpush.xpose.msra.mxu0 0.0
    %296 = vmatpush.xpose.msra.mxu0 0.0
    %297 = vmatpush.xpose.msra.mxu0 0.0
    %298 = vmatpush.xpose.msra.mxu0 0.0
    %299 = vmatpush.xpose.msra.mxu0 0.0
    %300 = vmatpush.xpose.msra.mxu0 0.0
    %301 = vmatpush.xpose.msra.mxu0 0.0
    %302 = vmatpush.xpose.msra.mxu0 %v285
    %303 = vmatmul.f32.gmra.mxu0 %v283
    %v304 = vpop.f32.mrf.mxu0
    %v305 = vadd.f32 0.0, %v304
    %306 = vdwg.mxu0
    %307 = vrot.lane.b32.xlu0 %v219, 96
    %v308 = vpop.permute.xlu0 %307
    %v309 = vsel %vm230, %v219, 0
    %v311 = vsel %vm230, %v308, 0
    %313 = vmatpush.xpose.msra.mxu0 0.0
    %314 = vmatpush.xpose.msra.mxu0 0.0
    %315 = vmatpush.xpose.msra.mxu0 0.0
    %316 = vmatpush.xpose.msra.mxu0 0.0
    %317 = vmatpush.xpose.msra.mxu0 0.0
    %318 = vmatpush.xpose.msra.mxu0 0.0
    %319 = vmatpush.xpose.msra.mxu0 0.0
    %320 = vmatpush.xpose.msra.mxu0 0.0
    %321 = vmatpush.xpose.msra.mxu0 0.0
    %322 = vmatpush.xpose.msra.mxu0 0.0
    %323 = vmatpush.xpose.msra.mxu0 0.0
    %324 = vmatpush.xpose.msra.mxu0 0.0
    %325 = vmatpush.xpose.msra.mxu0 0.0
    %326 = vmatpush.xpose.msra.mxu0 0.0
    %327 = vmatpush.xpose.msra.mxu0 0.0
    %328 = vmatpush.xpose.msra.mxu0 %v311
    %329 = vmatmul.f32.gmra.mxu0 %v309
    %v330 = vpop.f32.mrf.mxu0
    %v331 = vadd.f32 0.0, %v330
    %332 = vdwg.mxu0
    %333 = vrot.lane.b32.xlu0 %v221, 96
    %v334 = vpop.permute.xlu0 %333
    %v335 = vsel %vm230, %v221, 0
    %v337 = vsel %vm230, %v334, 0
    %339 = vmatpush.xpose.msra.mxu0 0.0
    %340 = vmatpush.xpose.msra.mxu0 0.0
    %341 = vmatpush.xpose.msra.mxu0 0.0
    %342 = vmatpush.xpose.msra.mxu0 0.0
    %343 = vmatpush.xpose.msra.mxu0 0.0
    %344 = vmatpush.xpose.msra.mxu0 0.0
    %345 = vmatpush.xpose.msra.mxu0 0.0
    %346 = vmatpush.xpose.msra.mxu0 0.0
    %347 = vmatpush.xpose.msra.mxu0 0.0
    %348 = vmatpush.xpose.msra.mxu0 0.0
    %349 = vmatpush.xpose.msra.mxu0 0.0
    %350 = vmatpush.xpose.msra.mxu0 0.0
    %351 = vmatpush.xpose.msra.mxu0 0.0
    %352 = vmatpush.xpose.msra.mxu0 0.0
    %353 = vmatpush.xpose.msra.mxu0 0.0
    %354 = vmatpush.xpose.msra.mxu0 %v337
    %355 = vmatmul.f32.gmra.mxu0 %v335
    %v356 = vpop.f32.mrf.mxu0
    %v357 = vadd.f32 0.0, %v356
    %358 = vdwg.mxu0
    %359 = vrot.lane.b32.xlu0 %v223, 96
    %v360 = vpop.permute.xlu0 %359
    %v361 = vsel %vm230, %v223, 0
    %v363 = vsel %vm230, %v360, 0
    %365 = vmatpush.xpose.msra.mxu0 0.0
    %366 = vmatpush.xpose.msra.mxu0 0.0
    %367 = vmatpush.xpose.msra.mxu0 0.0
    %368 = vmatpush.xpose.msra.mxu0 0.0
    %369 = vmatpush.xpose.msra.mxu0 0.0
    %370 = vmatpush.xpose.msra.mxu0 0.0
    %371 = vmatpush.xpose.msra.mxu0 0.0
    %372 = vmatpush.xpose.msra.mxu0 0.0
    %373 = vmatpush.xpose.msra.mxu0 0.0
    %374 = vmatpush.xpose.msra.mxu0 0.0
    %375 = vmatpush.xpose.msra.mxu0 0.0
    %376 = vmatpush.xpose.msra.mxu0 0.0
    %377 = vmatpush.xpose.msra.mxu0 0.0
    %378 = vmatpush.xpose.msra.mxu0 0.0
    %379 = vmatpush.xpose.msra.mxu0 0.0
    %380 = vmatpush.xpose.msra.mxu0 %v363
    %381 = vmatmul.f32.gmra.mxu0 %v361
    %v382 = vpop.f32.mrf.mxu0
    %v383 = vadd.f32 0.0, %v382
    %384 = vdwg.mxu0
    %385 = vrot.lane.b32.xlu0 %v225, 96
    %v386 = vpop.permute.xlu0 %385
    %v387 = vsel %vm230, %v225, 0
    %v389 = vsel %vm230, %v386, 0
    %391 = vmatpush.xpose.msra.mxu0 0.0
    %392 = vmatpush.xpose.msra.mxu0 0.0
    %393 = vmatpush.xpose.msra.mxu0 0.0
    %394 = vmatpush.xpose.msra.mxu0 0.0
    %395 = vmatpush.xpose.msra.mxu0 0.0
    %396 = vmatpush.xpose.msra.mxu0 0.0
    %397 = vmatpush.xpose.msra.mxu0 0.0
    %398 = vmatpush.xpose.msra.mxu0 0.0
    %399 = vmatpush.xpose.msra.mxu0 0.0
    %400 = vmatpush.xpose.msra.mxu0 0.0
    %401 = vmatpush.xpose.msra.mxu0 0.0
    %402 = vmatpush.xpose.msra.mxu0 0.0
    %403 = vmatpush.xpose.msra.mxu0 0.0
    %404 = vmatpush.xpose.msra.mxu0 0.0
    %405 = vmatpush.xpose.msra.mxu0 0.0
    %406 = vmatpush.xpose.msra.mxu0 %v389
    %407 = vmatmul.f32.gmra.mxu0 %v387
    %v408 = vpop.f32.mrf.mxu0
    %v409 = vadd.f32 0.0, %v408
    %410 = vdwg.mxu0
    %411 = vrot.lane.b32.xlu0 %v227, 96
    %v412 = vpop.permute.xlu0 %411
    %v413 = vsel %vm230, %v227, 0
    %v415 = vsel %vm230, %v412, 0
    %417 = vmatpush.xpose.msra.mxu0 0.0
    %418 = vmatpush.xpose.msra.mxu0 0.0
    %419 = vmatpush.xpose.msra.mxu0 0.0
    %420 = vmatpush.xpose.msra.mxu0 0.0
    %421 = vmatpush.xpose.msra.mxu0 0.0
    %422 = vmatpush.xpose.msra.mxu0 0.0
    %423 = vmatpush.xpose.msra.mxu0 0.0
    %424 = vmatpush.xpose.msra.mxu0 0.0
    %425 = vmatpush.xpose.msra.mxu0 0.0
    %426 = vmatpush.xpose.msra.mxu0 0.0
    %427 = vmatpush.xpose.msra.mxu0 0.0
    %428 = vmatpush.xpose.msra.mxu0 0.0
    %429 = vmatpush.xpose.msra.mxu0 0.0
    %430 = vmatpush.xpose.msra.mxu0 0.0
    %431 = vmatpush.xpose.msra.mxu0 0.0
    %432 = vmatpush.xpose.msra.mxu0 %v415
    %433 = vmatmul.f32.gmra.mxu0 %v413
    %v434 = vpop.f32.mrf.mxu0
    %v435 = vadd.f32 0.0, %v434
    %436 = vdwg.mxu0
    %v437 = vadd.f32 %v253, %v119
    %v438 = vadd.f32 %v279, %v120
    %v439 = vadd.f32 %v305, %v119
    %v440 = vadd.f32 %v331, %v120
    %v441 = vadd.f32 %v357, %v119
    %v442 = vadd.f32 %v383, %v120
    %v443 = vadd.f32 %v409, %v119
    %v444 = vadd.f32 %v435, %v120
    %v445 = vsel %vm230, %v437, -inf
    %446 = vmax.xlane.f32.xlu0 %v445
    %v447 = vpop.xlane.xlu0 %446
    %v448 = vsel %vm230, %v438, -inf
    %449 = vmax.xlane.f32.xlu0 %v448
    %v450 = vpop.xlane.xlu0 %449
    %v451 = vsel %vm230, %v439, -inf
    %452 = vmax.xlane.f32.xlu0 %v451
    %v453 = vpop.xlane.xlu0 %452
    %v454 = vsel %vm230, %v440, -inf
    %455 = vmax.xlane.f32.xlu0 %v454
    %v456 = vpop.xlane.xlu0 %455
    %v457 = vsel %vm230, %v441, -inf
    %458 = vmax.xlane.f32.xlu0 %v457
    %v459 = vpop.xlane.xlu0 %458
    %v460 = vsel %vm230, %v442, -inf
    %461 = vmax.xlane.f32.xlu0 %v460
    %v462 = vpop.xlane.xlu0 %461
    %v463 = vsel %vm230, %v443, -inf
    %464 = vmax.xlane.f32.xlu0 %v463
    %v465 = vpop.xlane.xlu0 %464
    %v466 = vsel %vm230, %v444, -inf
    %467 = vmax.xlane.f32.xlu0 %v466
    %v468 = vpop.xlane.xlu0 %467
    %v469 = vsub.f32 %v437, %v447
    %v470 = vsub.f32 %v438, %v450
    %v471 = vsub.f32 %v439, %v453
    %v472 = vsub.f32 %v440, %v456
    %v473 = vsub.f32 %v441, %v459
    %v474 = vsub.f32 %v442, %v462
    %v475 = vsub.f32 %v443, %v465
    %v476 = vsub.f32 %v444, %v468
    %v477 = vmul.f32 %v469, 1.442695
    %v478 = vpow.pop %v477
    %v479 = vmul.f32 %v470, 1.442695
    %v480 = vpow.pop %v479
    %v481 = vmul.f32 %v471, 1.442695
    %v482 = vpow.pop %v481
    %v483 = vmul.f32 %v472, 1.442695
    %v484 = vpow.pop %v483
    %v485 = vmul.f32 %v473, 1.442695
    %v486 = vpow.pop %v485
    %v487 = vmul.f32 %v474, 1.442695
    %v488 = vpow.pop %v487
    %v489 = vmul.f32 %v475, 1.442695
    %v490 = vpow.pop %v489
    %v491 = vmul.f32 %v476, 1.442695
    %v492 = vpow.pop %v491
    %v493 = vsel %vm230, %v478, 0.0
    %494 = vadd.xlane.f32.xlu0 %v493
    %v495 = vpop.xlane.xlu0 %494
    %v496 = vsel %vm230, %v480, 0.0
    %497 = vadd.xlane.f32.xlu0 %v496
    %v498 = vpop.xlane.xlu0 %497
    %v499 = vsel %vm230, %v482, 0.0
    %500 = vadd.xlane.f32.xlu0 %v499
    %v501 = vpop.xlane.xlu0 %500
    %v502 = vsel %vm230, %v484, 0.0
    %503 = vadd.xlane.f32.xlu0 %v502
    %v504 = vpop.xlane.xlu0 %503
    %v505 = vsel %vm230, %v486, 0.0
    %506 = vadd.xlane.f32.xlu0 %v505
    %v507 = vpop.xlane.xlu0 %506
    %v508 = vsel %vm230, %v488, 0.0
    %509 = vadd.xlane.f32.xlu0 %v508
    %v510 = vpop.xlane.xlu0 %509
    %v511 = vsel %vm230, %v490, 0.0
    %512 = vadd.xlane.f32.xlu0 %v511
    %v513 = vpop.xlane.xlu0 %512
    %v514 = vsel %vm230, %v492, 0.0
    %515 = vadd.xlane.f32.xlu0 %v514
    %v516 = vpop.xlane.xlu0 %515
    %v517 = vrcp.pop %v495
    %v518 = vmul.f32 %v495, %v517
    %v519 = vsub.f32 1.0, %v518
    %v520 = vmul.f32 %v517, %v519
    %v521 = vadd.f32 %v517, %v520
    %vm522 = vweird.f32 %v495
    %vm523 = vweird.f32 %v517
    %vm524 = vmor %vm522, %vm523
    %v525 = vsel %vm524, %v517, %v521
    %v526 = vand.u32 2147483647, %v495
    %vm527 = vcmp.eq.f32.partialorder %v526, 8.507059e+37
    %v528 = vand.u32 %v495, 2147483648
    %v529 = vor.u32 1.1754944e-38, %v528
    %v530 = vsel %vm527, %v529, %v525
    %v531 = vmul.f32 %v478, %v530
    %v532 = vrcp.pop %v498
    %v533 = vmul.f32 %v498, %v532
    %v534 = vsub.f32 1.0, %v533
    %v535 = vmul.f32 %v532, %v534
    %v536 = vadd.f32 %v532, %v535
    %vm537 = vweird.f32 %v498
    %vm538 = vweird.f32 %v532
    %vm539 = vmor %vm537, %vm538
    %v540 = vsel %vm539, %v532, %v536
    %v541 = vand.u32 2147483647, %v498
    %vm542 = vcmp.eq.f32.partialorder %v541, 8.507059e+37
    %v543 = vand.u32 %v498, 2147483648
    %v544 = vor.u32 1.1754944e-38, %v543
    %v545 = vsel %vm542, %v544, %v540
    %v546 = vmul.f32 %v480, %v545
    %v547 = vrcp.pop %v501
    %v548 = vmul.f32 %v501, %v547
    %v549 = vsub.f32 1.0, %v548
    %v550 = vmul.f32 %v547, %v549
    %v551 = vadd.f32 %v547, %v550
    %vm552 = vweird.f32 %v501
    %vm553 = vweird.f32 %v547
    %vm554 = vmor %vm552, %vm553
    %v555 = vsel %vm554, %v547, %v551
    %v556 = vand.u32 2147483647, %v501
    %vm557 = vcmp.eq.f32.partialorder %v556, 8.507059e+37
    %v558 = vand.u32 %v501, 2147483648
    %v559 = vor.u32 1.1754944e-38, %v558
    %v560 = vsel %vm557, %v559, %v555
    %v561 = vmul.f32 %v482, %v560
    %v562 = vrcp.pop %v504
    %v563 = vmul.f32 %v504, %v562
    %v564 = vsub.f32 1.0, %v563
    %v565 = vmul.f32 %v562, %v564
    %v566 = vadd.f32 %v562, %v565
    %vm567 = vweird.f32 %v504
    %vm568 = vweird.f32 %v562
    %vm569 = vmor %vm567, %vm568
    %v570 = vsel %vm569, %v562, %v566
    %v571 = vand.u32 2147483647, %v504
    %vm572 = vcmp.eq.f32.partialorder %v571, 8.507059e+37
    %v573 = vand.u32 %v504, 2147483648
    %v574 = vor.u32 1.1754944e-38, %v573
    %v575 = vsel %vm572, %v574, %v570
    %v576 = vmul.f32 %v484, %v575
    %v577 = vrcp.pop %v507
    %v578 = vmul.f32 %v507, %v577
    %v579 = vsub.f32 1.0, %v578
    %v580 = vmul.f32 %v577, %v579
    %v581 = vadd.f32 %v577, %v580
    %vm582 = vweird.f32 %v507
    %vm583 = vweird.f32 %v577
    %vm584 = vmor %vm582, %vm583
    %v585 = vsel %vm584, %v577, %v581
    %v586 = vand.u32 2147483647, %v507
    %vm587 = vcmp.eq.f32.partialorder %v586, 8.507059e+37
    %v588 = vand.u32 %v507, 2147483648
    %v589 = vor.u32 1.1754944e-38, %v588
    %v590 = vsel %vm587, %v589, %v585
    %v591 = vmul.f32 %v486, %v590
    %v592 = vrcp.pop %v510
    %v593 = vmul.f32 %v510, %v592
    %v594 = vsub.f32 1.0, %v593
    %v595 = vmul.f32 %v592, %v594
    %v596 = vadd.f32 %v592, %v595
    %vm597 = vweird.f32 %v510
    %vm598 = vweird.f32 %v592
    %vm599 = vmor %vm597, %vm598
    %v600 = vsel %vm599, %v592, %v596
    %v601 = vand.u32 2147483647, %v510
    %vm602 = vcmp.eq.f32.partialorder %v601, 8.507059e+37
    %v603 = vand.u32 %v510, 2147483648
    %v604 = vor.u32 1.1754944e-38, %v603
    %v605 = vsel %vm602, %v604, %v600
    %v606 = vmul.f32 %v488, %v605
    %v607 = vrcp.pop %v513
    %v608 = vmul.f32 %v513, %v607
    %v609 = vsub.f32 1.0, %v608
    %v610 = vmul.f32 %v607, %v609
    %v611 = vadd.f32 %v607, %v610
    %vm612 = vweird.f32 %v513
    %vm613 = vweird.f32 %v607
    %vm614 = vmor %vm612, %vm613
    %v615 = vsel %vm614, %v607, %v611
    %v616 = vand.u32 2147483647, %v513
    %vm617 = vcmp.eq.f32.partialorder %v616, 8.507059e+37
    %v618 = vand.u32 %v513, 2147483648
    %v619 = vor.u32 1.1754944e-38, %v618
    %v620 = vsel %vm617, %v619, %v615
    %v621 = vmul.f32 %v490, %v620
    %v622 = vrcp.pop %v516
    %v623 = vmul.f32 %v516, %v622
    %v624 = vsub.f32 1.0, %v623
    %v625 = vmul.f32 %v622, %v624
    %v626 = vadd.f32 %v622, %v625
    %vm627 = vweird.f32 %v516
    %vm628 = vweird.f32 %v622
    %vm629 = vmor %vm627, %vm628
    %v630 = vsel %vm629, %v622, %v626
    %v631 = vand.u32 2147483647, %v516
    %vm632 = vcmp.eq.f32.partialorder %v631, 8.507059e+37
    %v633 = vand.u32 %v516, 2147483648
    %v634 = vor.u32 1.1754944e-38, %v633
    %v635 = vsel %vm632, %v634, %v630
    %v636 = vmul.f32 %v492, %v635
    %637 = vrot.lane.b32.xlu0 %v209, 64
    %v638 = vpop.permute.xlu0 %637
    %v641 = vsel %vm230, %v531, 0
    %643 = vmatpush.msra.mxu0 0.0
    %644 = vmatpush.msra.mxu0 0.0
    %645 = vmatpush.msra.mxu0 0.0
    %646 = vmatpush.msra.mxu0 0.0
    %647 = vmatpush.msra.mxu0 0.0
    %648 = vmatpush.msra.mxu0 0.0
    %649 = vmatpush.msra.mxu0 0.0
    %650 = vmatpush.msra.mxu0 0.0
    %651 = vmatpush.msra.mxu0 0.0
    %652 = vmatpush.msra.mxu0 0.0
    %653 = vmatpush.msra.mxu0 0.0
    %654 = vmatpush.msra.mxu0 0.0
    %655 = vmatpush.msra.mxu0 0.0
    %656 = vmatpush.msra.mxu0 0.0
    %657 = vmatpush.msra.mxu0 0.0
    %658 = vmatpush.msra.mxu0 %v638
    %659 = vmatmul.f32.gmra.mxu0 %v641
    %v660 = vpop.f32.mrf.mxu0
    %v661 = vadd.f32 0.0, %v660
    %662 = vdwg.mxu0
    %663 = vrot.lane.b32.xlu0 %v212, 64
    %v664 = vpop.permute.xlu0 %663
    %v667 = vsel %vm230, %v546, 0
    %669 = vmatpush.msra.mxu0 0.0
    %670 = vmatpush.msra.mxu0 0.0
    %671 = vmatpush.msra.mxu0 0.0
    %672 = vmatpush.msra.mxu0 0.0
    %673 = vmatpush.msra.mxu0 0.0
    %674 = vmatpush.msra.mxu0 0.0
    %675 = vmatpush.msra.mxu0 0.0
    %676 = vmatpush.msra.mxu0 0.0
    %677 = vmatpush.msra.mxu0 0.0
    %678 = vmatpush.msra.mxu0 0.0
    %679 = vmatpush.msra.mxu0 0.0
    %680 = vmatpush.msra.mxu0 0.0
    %681 = vmatpush.msra.mxu0 0.0
    %682 = vmatpush.msra.mxu0 0.0
    %683 = vmatpush.msra.mxu0 0.0
    %684 = vmatpush.msra.mxu0 %v664
    %685 = vmatmul.f32.gmra.mxu0 %v667
    %v686 = vpop.f32.mrf.mxu0
    %v687 = vadd.f32 0.0, %v686
    %688 = vdwg.mxu0
    %689 = vrot.lane.b32.xlu0 %v217, 64
    %v690 = vpop.permute.xlu0 %689
    %v693 = vsel %vm230, %v561, 0
    %695 = vmatpush.msra.mxu0 0.0
    %696 = vmatpush.msra.mxu0 0.0
    %697 = vmatpush.msra.mxu0 0.0
    %698 = vmatpush.msra.mxu0 0.0
    %699 = vmatpush.msra.mxu0 0.0
    %700 = vmatpush.msra.mxu0 0.0
    %701 = vmatpush.msra.mxu0 0.0
    %702 = vmatpush.msra.mxu0 0.0
    %703 = vmatpush.msra.mxu0 0.0
    %704 = vmatpush.msra.mxu0 0.0
    %705 = vmatpush.msra.mxu0 0.0
    %706 = vmatpush.msra.mxu0 0.0
    %707 = vmatpush.msra.mxu0 0.0
    %708 = vmatpush.msra.mxu0 0.0
    %709 = vmatpush.msra.mxu0 0.0
    %710 = vmatpush.msra.mxu0 %v690
    %711 = vmatmul.f32.gmra.mxu0 %v693
    %v712 = vpop.f32.mrf.mxu0
    %v713 = vadd.f32 0.0, %v712
    %714 = vdwg.mxu0
    %715 = vrot.lane.b32.xlu0 %v219, 64
    %v716 = vpop.permute.xlu0 %715
    %v719 = vsel %vm230, %v576, 0
    %721 = vmatpush.msra.mxu0 0.0
    %722 = vmatpush.msra.mxu0 0.0
    %723 = vmatpush.msra.mxu0 0.0
    %724 = vmatpush.msra.mxu0 0.0
    %725 = vmatpush.msra.mxu0 0.0
    %726 = vmatpush.msra.mxu0 0.0
    %727 = vmatpush.msra.mxu0 0.0
    %728 = vmatpush.msra.mxu0 0.0
    %729 = vmatpush.msra.mxu0 0.0
    %730 = vmatpush.msra.mxu0 0.0
    %731 = vmatpush.msra.mxu0 0.0
    %732 = vmatpush.msra.mxu0 0.0
    %733 = vmatpush.msra.mxu0 0.0
    %734 = vmatpush.msra.mxu0 0.0
    %735 = vmatpush.msra.mxu0 0.0
    %736 = vmatpush.msra.mxu0 %v716
    %737 = vmatmul.f32.gmra.mxu0 %v719
    %v738 = vpop.f32.mrf.mxu0
    %v739 = vadd.f32 0.0, %v738
    %740 = vdwg.mxu0
    %741 = vrot.lane.b32.xlu0 %v221, 64
    %v742 = vpop.permute.xlu0 %741
    %v745 = vsel %vm230, %v591, 0
    %747 = vmatpush.msra.mxu0 0.0
    %748 = vmatpush.msra.mxu0 0.0
    %749 = vmatpush.msra.mxu0 0.0
    %750 = vmatpush.msra.mxu0 0.0
    %751 = vmatpush.msra.mxu0 0.0
    %752 = vmatpush.msra.mxu0 0.0
    %753 = vmatpush.msra.mxu0 0.0
    %754 = vmatpush.msra.mxu0 0.0
    %755 = vmatpush.msra.mxu0 0.0
    %756 = vmatpush.msra.mxu0 0.0
    %757 = vmatpush.msra.mxu0 0.0
    %758 = vmatpush.msra.mxu0 0.0
    %759 = vmatpush.msra.mxu0 0.0
    %760 = vmatpush.msra.mxu0 0.0
    %761 = vmatpush.msra.mxu0 0.0
    %762 = vmatpush.msra.mxu0 %v742
    %763 = vmatmul.f32.gmra.mxu0 %v745
    %v764 = vpop.f32.mrf.mxu0
    %v765 = vadd.f32 0.0, %v764
    %766 = vdwg.mxu0
    %767 = vrot.lane.b32.xlu0 %v223, 64
    %v768 = vpop.permute.xlu0 %767
    %v771 = vsel %vm230, %v606, 0
    %773 = vmatpush.msra.mxu0 0.0
    %774 = vmatpush.msra.mxu0 0.0
    %775 = vmatpush.msra.mxu0 0.0
    %776 = vmatpush.msra.mxu0 0.0
    %777 = vmatpush.msra.mxu0 0.0
    %778 = vmatpush.msra.mxu0 0.0
    %779 = vmatpush.msra.mxu0 0.0
    %780 = vmatpush.msra.mxu0 0.0
    %781 = vmatpush.msra.mxu0 0.0
    %782 = vmatpush.msra.mxu0 0.0
    %783 = vmatpush.msra.mxu0 0.0
    %784 = vmatpush.msra.mxu0 0.0
    %785 = vmatpush.msra.mxu0 0.0
    %786 = vmatpush.msra.mxu0 0.0
    %787 = vmatpush.msra.mxu0 0.0
    %788 = vmatpush.msra.mxu0 %v768
    %789 = vmatmul.f32.gmra.mxu0 %v771
    %v790 = vpop.f32.mrf.mxu0
    %v791 = vadd.f32 0.0, %v790
    %792 = vdwg.mxu0
    %793 = vrot.lane.b32.xlu0 %v225, 64
    %v794 = vpop.permute.xlu0 %793
    %v797 = vsel %vm230, %v621, 0
    %799 = vmatpush.msra.mxu0 0.0
    %800 = vmatpush.msra.mxu0 0.0
    %801 = vmatpush.msra.mxu0 0.0
    %802 = vmatpush.msra.mxu0 0.0
    %803 = vmatpush.msra.mxu0 0.0
    %804 = vmatpush.msra.mxu0 0.0
    %805 = vmatpush.msra.mxu0 0.0
    %806 = vmatpush.msra.mxu0 0.0
    %807 = vmatpush.msra.mxu0 0.0
    %808 = vmatpush.msra.mxu0 0.0
    %809 = vmatpush.msra.mxu0 0.0
    %810 = vmatpush.msra.mxu0 0.0
    %811 = vmatpush.msra.mxu0 0.0
    %812 = vmatpush.msra.mxu0 0.0
    %813 = vmatpush.msra.mxu0 0.0
    %814 = vmatpush.msra.mxu0 %v794
    %815 = vmatmul.f32.gmra.mxu0 %v797
    %v816 = vpop.f32.mrf.mxu0
    %v817 = vadd.f32 0.0, %v816
    %818 = vdwg.mxu0
    %819 = vrot.lane.b32.xlu0 %v227, 64
    %v820 = vpop.permute.xlu0 %819
    %v823 = vsel %vm230, %v636, 0
    %825 = vmatpush.msra.mxu0 0.0
    %826 = vmatpush.msra.mxu0 0.0
    %827 = vmatpush.msra.mxu0 0.0
    %828 = vmatpush.msra.mxu0 0.0
    %829 = vmatpush.msra.mxu0 0.0
    %830 = vmatpush.msra.mxu0 0.0
    %831 = vmatpush.msra.mxu0 0.0
    %832 = vmatpush.msra.mxu0 0.0
    %833 = vmatpush.msra.mxu0 0.0
    %834 = vmatpush.msra.mxu0 0.0
    %835 = vmatpush.msra.mxu0 0.0
    %836 = vmatpush.msra.mxu0 0.0
    %837 = vmatpush.msra.mxu0 0.0
    %838 = vmatpush.msra.mxu0 0.0
    %839 = vmatpush.msra.mxu0 0.0
    %840 = vmatpush.msra.mxu0 %v820
    %841 = vmatmul.f32.gmra.mxu0 %v823
    %v842 = vpop.f32.mrf.mxu0
    %v843 = vadd.f32 0.0, %v842
    %844 = vdwg.mxu0
    %847 = vrot.lane.b32.xlu0 %v713, 8
    %v848 = vpop.permute.xlu0 %847
    %849 = vrot.lane.b32.xlu0 %v739, 8
    %v850 = vpop.permute.xlu0 %849
    %855 = vrot.lane.b32.xlu0 %v765, 16
    %v856 = vpop.permute.xlu0 %855
    %857 = vrot.lane.b32.xlu0 %v791, 16
    %v858 = vpop.permute.xlu0 %857
    %863 = vrot.lane.b32.xlu0 %v817, 24
    %v864 = vpop.permute.xlu0 %863
    %865 = vrot.lane.b32.xlu0 %v843, 24
    %v866 = vpop.permute.xlu0 %865
    %v869 = vsel %vm230, %v661, %v848
    %v870 = vsel %vm230, %v687, %v850
    %vm871 = vcmask 130048
    %v872 = vsel %vm871, %v869, %v856
    %v873 = vsel %vm871, %v870, %v858
    %vm874 = vcmask 195584
    %v875 = vsel %vm874, %v872, %v864
    %v876 = vsel %vm874, %v873, %v866
    %881 = vrot.lane.b32.xlu0 %v95, 64
    %v882 = vpop.permute.xlu0 %881
    %883 = vrot.lane.b32.xlu0 %v98, 64
    %v884 = vpop.permute.xlu0 %883
    %885 = vrot.lane.b32.xlu0 %v101, 64
    %v886 = vpop.permute.xlu0 %885
    %887 = vrot.lane.b32.xlu0 %v104, 64
    %v888 = vpop.permute.xlu0 %887
    %v894 = vsel %vm127, %v875, 0
    %v897 = vsel %vm127, %v876, 0
    %899 = vmatpush.msra.mxu0 0.0
    %900 = vmatpush.msra.mxu0 0.0
    %901 = vmatpush.msra.mxu0 0.0
    %902 = vmatpush.msra.mxu0 0.0
    %903 = vmatpush.msra.mxu0 0.0
    %904 = vmatpush.msra.mxu0 0.0
    %905 = vmatpush.msra.mxu0 0.0
    %906 = vmatpush.msra.mxu0 0.0
    %907 = vmatpush.msra.mxu0 0.0
    %908 = vmatpush.msra.mxu0 0.0
    %909 = vmatpush.msra.mxu0 0.0
    %910 = vmatpush.msra.mxu0 0.0
    %911 = vmatpush.msra.mxu0 %v888
    %912 = vmatpush.msra.mxu0 %v886
    %913 = vmatpush.msra.mxu0 %v884
    %914 = vmatpush.msra.mxu0 %v882
    %915 = vmatmul.f32.gmra.mxu0 %v894
    %v916 = vpop.f32.mrf.mxu0
    %v917 = vadd.f32 0.0, %v916
    %918 = vmatmul.f32.gmra.mxu0 %v897
    %v919 = vpop.f32.mrf.mxu0
    %v920 = vadd.f32 0.0, %v919
    %921 = vdwg.mxu0
    %v922 = vadd.f32 %v88, %v917
    %v923 = vadd.f32 %v89, %v920
    %v924 = vsel %vm127, %v922, 0.0
    %925 = vadd.xlane.f32.xlu0 %v924
    %v926 = vpop.xlane.xlu0 %925
    %v927 = vsel %vm127, %v923, 0.0
    %928 = vadd.xlane.f32.xlu0 %v927
    %v929 = vpop.xlane.xlu0 %928
    %v930 = vmul.f32 %v926, %v140
    %v931 = vmul.f32 %v929, %v140
    %v932 = vsub.f32 %v922, %v930
    %v933 = vsub.f32 %v923, %v931
    %v934 = vmul.f32 %v932, %v932
    %v935 = vmul.f32 %v933, %v933
    %v936 = vsel %vm127, %v934, 0.0
    %937 = vadd.xlane.f32.xlu0 %v936
    %v938 = vpop.xlane.xlu0 %937
    %v939 = vsel %vm127, %v935, 0.0
    %940 = vadd.xlane.f32.xlu0 %v939
    %v941 = vpop.xlane.xlu0 %940
    %v942 = vmul.f32 %v938, 0.032258064
    %v943 = vmul.f32 %v941, 0.032258064
    %v944 = vperm.slane %v106, 2
    %v945 = vmul.f32 %v944, %v932
    %v946 = vmul.f32 %v944, %v933
    %v947 = vadd.f32 %v942, 1e-06
    %v948 = vadd.f32 %v943, 1e-06
    %v949 = vrsqrt.pop %v947
    %v950 = vmul.f32 %v949, %v947
    %v951 = vmul.f32 %v950, %v949
    %v952 = vmul.f32 0.5, %v951
    %v953 = vsub.f32 1.5, %v952
    %v954 = vmul.f32 %v949, %v953
    %vm955 = vweird.f32 %v947
    %vm956 = vweird.f32 %v949
    %vm957 = vmor %vm955, %vm956
    %v958 = vsel %vm957, %v949, %v954
    %v959 = vrsqrt.pop %v948
    %v960 = vmul.f32 %v959, %v948
    %v961 = vmul.f32 %v960, %v959
    %v962 = vmul.f32 0.5, %v961
    %v963 = vsub.f32 1.5, %v962
    %v964 = vmul.f32 %v959, %v963
    %vm965 = vweird.f32 %v948
    %vm966 = vweird.f32 %v959
    %vm967 = vmor %vm965, %vm966
    %v968 = vsel %vm967, %v959, %v964
    %v969 = vmul.f32 %v945, %v958
    %v970 = vmul.f32 %v946, %v968
    %v971 = vperm.slane %v106, 3
    %v972 = vadd.f32 %v969, %v971
    %v973 = vadd.f32 %v970, %v971
    %978 = vrot.lane.b32.xlu0 %v94, 32
    %v979 = vpop.permute.xlu0 %978
    %980 = vrot.lane.b32.xlu0 %v97, 32
    %v981 = vpop.permute.xlu0 %980
    %982 = vrot.lane.b32.xlu0 %v100, 32
    %v983 = vpop.permute.xlu0 %982
    %984 = vrot.lane.b32.xlu0 %v103, 32
    %v985 = vpop.permute.xlu0 %984
    %v991 = vsel %vm127, %v972, 0
    %v994 = vsel %vm127, %v973, 0
    %996 = vmatpush.msra.mxu0 0.0
    %997 = vmatpush.msra.mxu0 0.0
    %998 = vmatpush.msra.mxu0 0.0
    %999 = vmatpush.msra.mxu0 0.0
    %1000 = vmatpush.msra.mxu0 0.0
    %1001 = vmatpush.msra.mxu0 0.0
    %1002 = vmatpush.msra.mxu0 0.0
    %1003 = vmatpush.msra.mxu0 0.0
    %1004 = vmatpush.msra.mxu0 0.0
    %1005 = vmatpush.msra.mxu0 0.0
    %1006 = vmatpush.msra.mxu0 0.0
    %1007 = vmatpush.msra.mxu0 0.0
    %1008 = vmatpush.msra.mxu0 %v985
    %1009 = vmatpush.msra.mxu0 %v983
    %1010 = vmatpush.msra.mxu0 %v981
    %1011 = vmatpush.msra.mxu0 %v979
    %1012 = vmatmul.f32.gmra.mxu0 %v991
    %v1013 = vpop.f32.mrf.mxu0
    %v1014 = vadd.f32 0.0, %v1013
    %1015 = vmatmul.f32.gmra.mxu0 %v994
    %v1016 = vpop.f32.mrf.mxu0
    %v1017 = vadd.f32 0.0, %v1016
    %1018 = vdwg.mxu0
    %v1020 = vsel %vm127, %v90, 0
    %v1023 = vsel %vm127, %v91, 0
    %v1026 = vsel %vm127, %v92, 0
    %v1029 = vsel %vm127, %v93, 0
    %1031 = vmatpush.msra.mxu0 0.0
    %1032 = vmatpush.msra.mxu0 0.0
    %1033 = vmatpush.msra.mxu0 0.0
    %1034 = vmatpush.msra.mxu0 0.0
    %1035 = vmatpush.msra.mxu0 0.0
    %1036 = vmatpush.msra.mxu0 0.0
    %1037 = vmatpush.msra.mxu0 0.0
    %1038 = vmatpush.msra.mxu0 0.0
    %1039 = vmatpush.msra.mxu0 0.0
    %1040 = vmatpush.msra.mxu0 0.0
    %1041 = vmatpush.msra.mxu0 0.0
    %1042 = vmatpush.msra.mxu0 0.0
    %1043 = vmatpush.msra.mxu0 %v104
    %1044 = vmatpush.msra.mxu0 %v101
    %1045 = vmatpush.msra.mxu0 %v98
    %1046 = vmatpush.msra.mxu0 %v95
    %1047 = vmatmul.f32.gmra.mxu0 %v1020
    %v1048 = vpop.f32.mrf.mxu0
    %v1049 = vadd.f32 0.0, %v1048
    %1050 = vmatmul.f32.gmra.mxu0 %v1023
    %v1051 = vpop.f32.mrf.mxu0
    %v1052 = vadd.f32 0.0, %v1051
    %1053 = vmatmul.f32.gmra.mxu0 %v1026
    %v1054 = vpop.f32.mrf.mxu0
    %v1055 = vadd.f32 0.0, %v1054
    %1056 = vmatmul.f32.gmra.mxu0 %v1029
    %v1057 = vpop.f32.mrf.mxu0
    %v1058 = vadd.f32 0.0, %v1057
    %1059 = vdwg.mxu0
    %1062 = vrot.lane.b32.xlu0 %v1014, 120
    %v1063 = vpop.permute.xlu0 %1062
    %1064 = vrot.lane.b32.xlu0 %v1017, 120
    %v1065 = vpop.permute.xlu0 %1064
    %1066 = vrot.lane.b32.xlu0 %v1014, 112
    %v1067 = vpop.permute.xlu0 %1066
    %1068 = vrot.lane.b32.xlu0 %v1017, 112
    %v1069 = vpop.permute.xlu0 %1068
    %1070 = vrot.lane.b32.xlu0 %v1014, 104
    %v1071 = vpop.permute.xlu0 %1070
    %1072 = vrot.lane.b32.xlu0 %v1017, 104
    %v1073 = vpop.permute.xlu0 %1072
    %1078 = vrot.lane.b32.xlu0 %v1049, 120
    %v1079 = vpop.permute.xlu0 %1078
    %1080 = vrot.lane.b32.xlu0 %v1052, 120
    %v1081 = vpop.permute.xlu0 %1080
    %1082 = vrot.lane.b32.xlu0 %v1055, 120
    %v1083 = vpop.permute.xlu0 %1082
    %1084 = vrot.lane.b32.xlu0 %v1058, 120
    %v1085 = vpop.permute.xlu0 %1084
    %1086 = vrot.lane.b32.xlu0 %v1049, 112
    %v1087 = vpop.permute.xlu0 %1086
    %1088 = vrot.lane.b32.xlu0 %v1052, 112
    %v1089 = vpop.permute.xlu0 %1088
    %1090 = vrot.lane.b32.xlu0 %v1055, 112
    %v1091 = vpop.permute.xlu0 %1090
    %1092 = vrot.lane.b32.xlu0 %v1058, 112
    %v1093 = vpop.permute.xlu0 %1092
    %1094 = vrot.lane.b32.xlu0 %v1049, 104
    %v1095 = vpop.permute.xlu0 %1094
    %1096 = vrot.lane.b32.xlu0 %v1052, 104
    %v1097 = vpop.permute.xlu0 %1096
    %1098 = vrot.lane.b32.xlu0 %v1055, 104
    %v1099 = vpop.permute.xlu0 %1098
    %1100 = vrot.lane.b32.xlu0 %v1058, 104
    %v1101 = vpop.permute.xlu0 %1100
    %v1102 = vsel %vm230, %v1014, 0
    %v1104 = vsel %vm230, %v1049, 0
    %v1106 = vsel %vm230, %v1052, 0
    %1108 = vmatpush.xpose.msra.mxu0 0.0
    %1109 = vmatpush.xpose.msra.mxu0 0.0
    %1110 = vmatpush.xpose.msra.mxu0 0.0
    %1111 = vmatpush.xpose.msra.mxu0 0.0
    %1112 = vmatpush.xpose.msra.mxu0 0.0
    %1113 = vmatpush.xpose.msra.mxu0 0.0
    %1114 = vmatpush.xpose.msra.mxu0 0.0
    %1115 = vmatpush.xpose.msra.mxu0 0.0
    %1116 = vmatpush.xpose.msra.mxu0 0.0
    %1117 = vmatpush.xpose.msra.mxu0 0.0
    %1118 = vmatpush.xpose.msra.mxu0 0.0
    %1119 = vmatpush.xpose.msra.mxu0 0.0
    %1120 = vmatpush.xpose.msra.mxu0 0.0
    %1121 = vmatpush.xpose.msra.mxu0 0.0
    %1122 = vmatpush.xpose.msra.mxu0 %v1106
    %1123 = vmatpush.xpose.msra.mxu0 %v1104
    %1124 = vmatmul.f32.gmra.mxu0 %v1102
    %v1125 = vpop.f32.mrf.mxu0
    %v1126 = vadd.f32 0.0, %v1125
    %1127 = vdwg.mxu0
    %v1128 = vsel %vm230, %v1017, 0
    %v1130 = vsel %vm230, %v1055, 0
    %v1132 = vsel %vm230, %v1058, 0
    %1134 = vmatpush.xpose.msra.mxu0 0.0
    %1135 = vmatpush.xpose.msra.mxu0 0.0
    %1136 = vmatpush.xpose.msra.mxu0 0.0
    %1137 = vmatpush.xpose.msra.mxu0 0.0
    %1138 = vmatpush.xpose.msra.mxu0 0.0
    %1139 = vmatpush.xpose.msra.mxu0 0.0
    %1140 = vmatpush.xpose.msra.mxu0 0.0
    %1141 = vmatpush.xpose.msra.mxu0 0.0
    %1142 = vmatpush.xpose.msra.mxu0 0.0
    %1143 = vmatpush.xpose.msra.mxu0 0.0
    %1144 = vmatpush.xpose.msra.mxu0 0.0
    %1145 = vmatpush.xpose.msra.mxu0 0.0
    %1146 = vmatpush.xpose.msra.mxu0 0.0
    %1147 = vmatpush.xpose.msra.mxu0 0.0
    %1148 = vmatpush.xpose.msra.mxu0 %v1132
    %1149 = vmatpush.xpose.msra.mxu0 %v1130
    %1150 = vmatmul.f32.gmra.mxu0 %v1128
    %v1151 = vpop.f32.mrf.mxu0
    %v1152 = vadd.f32 0.0, %v1151
    %1153 = vdwg.mxu0
    %v1154 = vsel %vm230, %v1063, 0
    %v1156 = vsel %vm230, %v1079, 0
    %v1158 = vsel %vm230, %v1081, 0
    %1160 = vmatpush.xpose.msra.mxu0 0.0
    %1161 = vmatpush.xpose.msra.mxu0 0.0
    %1162 = vmatpush.xpose.msra.mxu0 0.0
    %1163 = vmatpush.xpose.msra.mxu0 0.0
    %1164 = vmatpush.xpose.msra.mxu0 0.0
    %1165 = vmatpush.xpose.msra.mxu0 0.0
    %1166 = vmatpush.xpose.msra.mxu0 0.0
    %1167 = vmatpush.xpose.msra.mxu0 0.0
    %1168 = vmatpush.xpose.msra.mxu0 0.0
    %1169 = vmatpush.xpose.msra.mxu0 0.0
    %1170 = vmatpush.xpose.msra.mxu0 0.0
    %1171 = vmatpush.xpose.msra.mxu0 0.0
    %1172 = vmatpush.xpose.msra.mxu0 0.0
    %1173 = vmatpush.xpose.msra.mxu0 0.0
    %1174 = vmatpush.xpose.msra.mxu0 %v1158
    %1175 = vmatpush.xpose.msra.mxu0 %v1156
    %1176 = vmatmul.f32.gmra.mxu0 %v1154
    %v1177 = vpop.f32.mrf.mxu0
    %v1178 = vadd.f32 0.0, %v1177
    %1179 = vdwg.mxu0
    %v1180 = vsel %vm230, %v1065, 0
    %v1182 = vsel %vm230, %v1083, 0
    %v1184 = vsel %vm230, %v1085, 0
    %1186 = vmatpush.xpose.msra.mxu0 0.0
    %1187 = vmatpush.xpose.msra.mxu0 0.0
    %1188 = vmatpush.xpose.msra.mxu0 0.0
    %1189 = vmatpush.xpose.msra.mxu0 0.0
    %1190 = vmatpush.xpose.msra.mxu0 0.0
    %1191 = vmatpush.xpose.msra.mxu0 0.0
    %1192 = vmatpush.xpose.msra.mxu0 0.0
    %1193 = vmatpush.xpose.msra.mxu0 0.0
    %1194 = vmatpush.xpose.msra.mxu0 0.0
    %1195 = vmatpush.xpose.msra.mxu0 0.0
    %1196 = vmatpush.xpose.msra.mxu0 0.0
    %1197 = vmatpush.xpose.msra.mxu0 0.0
    %1198 = vmatpush.xpose.msra.mxu0 0.0
    %1199 = vmatpush.xpose.msra.mxu0 0.0
    %1200 = vmatpush.xpose.msra.mxu0 %v1184
    %1201 = vmatpush.xpose.msra.mxu0 %v1182
    %1202 = vmatmul.f32.gmra.mxu0 %v1180
    %v1203 = vpop.f32.mrf.mxu0
    %v1204 = vadd.f32 0.0, %v1203
    %1205 = vdwg.mxu0
    %v1206 = vsel %vm230, %v1067, 0
    %v1208 = vsel %vm230, %v1087, 0
    %v1210 = vsel %vm230, %v1089, 0
    %1212 = vmatpush.xpose.msra.mxu0 0.0
    %1213 = vmatpush.xpose.msra.mxu0 0.0
    %1214 = vmatpush.xpose.msra.mxu0 0.0
    %1215 = vmatpush.xpose.msra.mxu0 0.0
    %1216 = vmatpush.xpose.msra.mxu0 0.0
    %1217 = vmatpush.xpose.msra.mxu0 0.0
    %1218 = vmatpush.xpose.msra.mxu0 0.0
    %1219 = vmatpush.xpose.msra.mxu0 0.0
    %1220 = vmatpush.xpose.msra.mxu0 0.0
    %1221 = vmatpush.xpose.msra.mxu0 0.0
    %1222 = vmatpush.xpose.msra.mxu0 0.0
    %1223 = vmatpush.xpose.msra.mxu0 0.0
    %1224 = vmatpush.xpose.msra.mxu0 0.0
    %1225 = vmatpush.xpose.msra.mxu0 0.0
    %1226 = vmatpush.xpose.msra.mxu0 %v1210
    %1227 = vmatpush.xpose.msra.mxu0 %v1208
    %1228 = vmatmul.f32.gmra.mxu0 %v1206
    %v1229 = vpop.f32.mrf.mxu0
    %v1230 = vadd.f32 0.0, %v1229
    %1231 = vdwg.mxu0
    %v1232 = vsel %vm230, %v1069, 0
    %v1234 = vsel %vm230, %v1091, 0
    %v1236 = vsel %vm230, %v1093, 0
    %1238 = vmatpush.xpose.msra.mxu0 0.0
    %1239 = vmatpush.xpose.msra.mxu0 0.0
    %1240 = vmatpush.xpose.msra.mxu0 0.0
    %1241 = vmatpush.xpose.msra.mxu0 0.0
    %1242 = vmatpush.xpose.msra.mxu0 0.0
    %1243 = vmatpush.xpose.msra.mxu0 0.0
    %1244 = vmatpush.xpose.msra.mxu0 0.0
    %1245 = vmatpush.xpose.msra.mxu0 0.0
    %1246 = vmatpush.xpose.msra.mxu0 0.0
    %1247 = vmatpush.xpose.msra.mxu0 0.0
    %1248 = vmatpush.xpose.msra.mxu0 0.0
    %1249 = vmatpush.xpose.msra.mxu0 0.0
    %1250 = vmatpush.xpose.msra.mxu0 0.0
    %1251 = vmatpush.xpose.msra.mxu0 0.0
    %1252 = vmatpush.xpose.msra.mxu0 %v1236
    %1253 = vmatpush.xpose.msra.mxu0 %v1234
    %1254 = vmatmul.f32.gmra.mxu0 %v1232
    %v1255 = vpop.f32.mrf.mxu0
    %v1256 = vadd.f32 0.0, %v1255
    %1257 = vdwg.mxu0
    %v1258 = vsel %vm230, %v1071, 0
    %v1260 = vsel %vm230, %v1095, 0
    %v1262 = vsel %vm230, %v1097, 0
    %1264 = vmatpush.xpose.msra.mxu0 0.0
    %1265 = vmatpush.xpose.msra.mxu0 0.0
    %1266 = vmatpush.xpose.msra.mxu0 0.0
    %1267 = vmatpush.xpose.msra.mxu0 0.0
    %1268 = vmatpush.xpose.msra.mxu0 0.0
    %1269 = vmatpush.xpose.msra.mxu0 0.0
    %1270 = vmatpush.xpose.msra.mxu0 0.0
    %1271 = vmatpush.xpose.msra.mxu0 0.0
    %1272 = vmatpush.xpose.msra.mxu0 0.0
    %1273 = vmatpush.xpose.msra.mxu0 0.0
    %1274 = vmatpush.xpose.msra.mxu0 0.0
    %1275 = vmatpush.xpose.msra.mxu0 0.0
    %1276 = vmatpush.xpose.msra.mxu0 0.0
    %1277 = vmatpush.xpose.msra.mxu0 0.0
    %1278 = vmatpush.xpose.msra.mxu0 %v1262
    %1279 = vmatpush.xpose.msra.mxu0 %v1260
    %1280 = vmatmul.f32.gmra.mxu0 %v1258
    %v1281 = vpop.f32.mrf.mxu0
    %v1282 = vadd.f32 0.0, %v1281
    %1283 = vdwg.mxu0
    %v1284 = vsel %vm230, %v1073, 0
    %v1286 = vsel %vm230, %v1099, 0
    %v1288 = vsel %vm230, %v1101, 0
    %1290 = vmatpush.xpose.msra.mxu0 0.0
    %1291 = vmatpush.xpose.msra.mxu0 0.0
    %1292 = vmatpush.xpose.msra.mxu0 0.0
    %1293 = vmatpush.xpose.msra.mxu0 0.0
    %1294 = vmatpush.xpose.msra.mxu0 0.0
    %1295 = vmatpush.xpose.msra.mxu0 0.0
    %1296 = vmatpush.xpose.msra.mxu0 0.0
    %1297 = vmatpush.xpose.msra.mxu0 0.0
    %1298 = vmatpush.xpose.msra.mxu0 0.0
    %1299 = vmatpush.xpose.msra.mxu0 0.0
    %1300 = vmatpush.xpose.msra.mxu0 0.0
    %1301 = vmatpush.xpose.msra.mxu0 0.0
    %1302 = vmatpush.xpose.msra.mxu0 0.0
    %1303 = vmatpush.xpose.msra.mxu0 0.0
    %1304 = vmatpush.xpose.msra.mxu0 %v1288
    %1305 = vmatpush.xpose.msra.mxu0 %v1286
    %1306 = vmatmul.f32.gmra.mxu0 %v1284
    %v1307 = vpop.f32.mrf.mxu0
    %v1308 = vadd.f32 0.0, %v1307
    %1309 = vdwg.mxu0
    %v1312 = vperm.slane %v125, 0
    %v1313 = vperm.slane %v126, 0
    %v1316 = vadd.f32 %v1126, %v1312
    %v1317 = vadd.f32 %v1152, %v1313
    %v1318 = vadd.f32 %v1178, %v1312
    %v1319 = vadd.f32 %v1204, %v1313
    %v1320 = vadd.f32 %v1230, %v1312
    %v1321 = vadd.f32 %v1256, %v1313
    %v1322 = vadd.f32 %v1282, %v1312
    %v1323 = vadd.f32 %v1308, %v1313
    %v1324 = vsel %vm871, %v1316, -inf
    %1325 = vmax.xlane.f32.xlu0 %v1324
    %v1326 = vpop.xlane.xlu0 %1325
    %v1327 = vsel %vm871, %v1317, -inf
    %1328 = vmax.xlane.f32.xlu0 %v1327
    %v1329 = vpop.xlane.xlu0 %1328
    %v1330 = vsel %vm871, %v1318, -inf
    %1331 = vmax.xlane.f32.xlu0 %v1330
    %v1332 = vpop.xlane.xlu0 %1331
    %v1333 = vsel %vm871, %v1319, -inf
    %1334 = vmax.xlane.f32.xlu0 %v1333
    %v1335 = vpop.xlane.xlu0 %1334
    %v1336 = vsel %vm871, %v1320, -inf
    %1337 = vmax.xlane.f32.xlu0 %v1336
    %v1338 = vpop.xlane.xlu0 %1337
    %v1339 = vsel %vm871, %v1321, -inf
    %1340 = vmax.xlane.f32.xlu0 %v1339
    %v1341 = vpop.xlane.xlu0 %1340
    %v1342 = vsel %vm871, %v1322, -inf
    %1343 = vmax.xlane.f32.xlu0 %v1342
    %v1344 = vpop.xlane.xlu0 %1343
    %v1345 = vsel %vm871, %v1323, -inf
    %1346 = vmax.xlane.f32.xlu0 %v1345
    %v1347 = vpop.xlane.xlu0 %1346
    %v1348 = vsub.f32 %v1316, %v1326
    %v1349 = vsub.f32 %v1317, %v1329
    %v1350 = vsub.f32 %v1318, %v1332
    %v1351 = vsub.f32 %v1319, %v1335
    %v1352 = vsub.f32 %v1320, %v1338
    %v1353 = vsub.f32 %v1321, %v1341
    %v1354 = vsub.f32 %v1322, %v1344
    %v1355 = vsub.f32 %v1323, %v1347
    %v1356 = vmul.f32 %v1348, 1.442695
    %v1357 = vpow.pop %v1356
    %v1358 = vmul.f32 %v1349, 1.442695
    %v1359 = vpow.pop %v1358
    %v1360 = vmul.f32 %v1350, 1.442695
    %v1361 = vpow.pop %v1360
    %v1362 = vmul.f32 %v1351, 1.442695
    %v1363 = vpow.pop %v1362
    %v1364 = vmul.f32 %v1352, 1.442695
    %v1365 = vpow.pop %v1364
    %v1366 = vmul.f32 %v1353, 1.442695
    %v1367 = vpow.pop %v1366
    %v1368 = vmul.f32 %v1354, 1.442695
    %v1369 = vpow.pop %v1368
    %v1370 = vmul.f32 %v1355, 1.442695
    %v1371 = vpow.pop %v1370
    %v1372 = vsel %vm871, %v1357, 0.0
    %1373 = vadd.xlane.f32.xlu0 %v1372
    %v1374 = vpop.xlane.xlu0 %1373
    %v1375 = vsel %vm871, %v1359, 0.0
    %1376 = vadd.xlane.f32.xlu0 %v1375
    %v1377 = vpop.xlane.xlu0 %1376
    %v1378 = vsel %vm871, %v1361, 0.0
    %1379 = vadd.xlane.f32.xlu0 %v1378
    %v1380 = vpop.xlane.xlu0 %1379
    %v1381 = vsel %vm871, %v1363, 0.0
    %1382 = vadd.xlane.f32.xlu0 %v1381
    %v1383 = vpop.xlane.xlu0 %1382
    %v1384 = vsel %vm871, %v1365, 0.0
    %1385 = vadd.xlane.f32.xlu0 %v1384
    %v1386 = vpop.xlane.xlu0 %1385
    %v1387 = vsel %vm871, %v1367, 0.0
    %1388 = vadd.xlane.f32.xlu0 %v1387
    %v1389 = vpop.xlane.xlu0 %1388
    %v1390 = vsel %vm871, %v1369, 0.0
    %1391 = vadd.xlane.f32.xlu0 %v1390
    %v1392 = vpop.xlane.xlu0 %1391
    %v1393 = vsel %vm871, %v1371, 0.0
    %1394 = vadd.xlane.f32.xlu0 %v1393
    %v1395 = vpop.xlane.xlu0 %1394
    %v1396 = vrcp.pop %v1374
    %v1397 = vmul.f32 %v1374, %v1396
    %v1398 = vsub.f32 1.0, %v1397
    %v1399 = vmul.f32 %v1396, %v1398
    %v1400 = vadd.f32 %v1396, %v1399
    %vm1401 = vweird.f32 %v1374
    %vm1402 = vweird.f32 %v1396
    %vm1403 = vmor %vm1401, %vm1402
    %v1404 = vsel %vm1403, %v1396, %v1400
    %v1405 = vand.u32 2147483647, %v1374
    %vm1406 = vcmp.eq.f32.partialorder %v1405, 8.507059e+37
    %v1407 = vand.u32 %v1374, 2147483648
    %v1408 = vor.u32 1.1754944e-38, %v1407
    %v1409 = vsel %vm1406, %v1408, %v1404
    %v1410 = vmul.f32 %v1357, %v1409
    %v1411 = vrcp.pop %v1377
    %v1412 = vmul.f32 %v1377, %v1411
    %v1413 = vsub.f32 1.0, %v1412
    %v1414 = vmul.f32 %v1411, %v1413
    %v1415 = vadd.f32 %v1411, %v1414
    %vm1416 = vweird.f32 %v1377
    %vm1417 = vweird.f32 %v1411
    %vm1418 = vmor %vm1416, %vm1417
    %v1419 = vsel %vm1418, %v1411, %v1415
    %v1420 = vand.u32 2147483647, %v1377
    %vm1421 = vcmp.eq.f32.partialorder %v1420, 8.507059e+37
    %v1422 = vand.u32 %v1377, 2147483648
    %v1423 = vor.u32 1.1754944e-38, %v1422
    %v1424 = vsel %vm1421, %v1423, %v1419
    %v1425 = vmul.f32 %v1359, %v1424
    %v1426 = vrcp.pop %v1380
    %v1427 = vmul.f32 %v1380, %v1426
    %v1428 = vsub.f32 1.0, %v1427
    %v1429 = vmul.f32 %v1426, %v1428
    %v1430 = vadd.f32 %v1426, %v1429
    %vm1431 = vweird.f32 %v1380
    %vm1432 = vweird.f32 %v1426
    %vm1433 = vmor %vm1431, %vm1432
    %v1434 = vsel %vm1433, %v1426, %v1430
    %v1435 = vand.u32 2147483647, %v1380
    %vm1436 = vcmp.eq.f32.partialorder %v1435, 8.507059e+37
    %v1437 = vand.u32 %v1380, 2147483648
    %v1438 = vor.u32 1.1754944e-38, %v1437
    %v1439 = vsel %vm1436, %v1438, %v1434
    %v1440 = vmul.f32 %v1361, %v1439
    %v1441 = vrcp.pop %v1383
    %v1442 = vmul.f32 %v1383, %v1441
    %v1443 = vsub.f32 1.0, %v1442
    %v1444 = vmul.f32 %v1441, %v1443
    %v1445 = vadd.f32 %v1441, %v1444
    %vm1446 = vweird.f32 %v1383
    %vm1447 = vweird.f32 %v1441
    %vm1448 = vmor %vm1446, %vm1447
    %v1449 = vsel %vm1448, %v1441, %v1445
    %v1450 = vand.u32 2147483647, %v1383
    %vm1451 = vcmp.eq.f32.partialorder %v1450, 8.507059e+37
    %v1452 = vand.u32 %v1383, 2147483648
    %v1453 = vor.u32 1.1754944e-38, %v1452
    %v1454 = vsel %vm1451, %v1453, %v1449
    %v1455 = vmul.f32 %v1363, %v1454
    %v1456 = vrcp.pop %v1386
    %v1457 = vmul.f32 %v1386, %v1456
    %v1458 = vsub.f32 1.0, %v1457
    %v1459 = vmul.f32 %v1456, %v1458
    %v1460 = vadd.f32 %v1456, %v1459
    %vm1461 = vweird.f32 %v1386
    %vm1462 = vweird.f32 %v1456
    %vm1463 = vmor %vm1461, %vm1462
    %v1464 = vsel %vm1463, %v1456, %v1460
    %v1465 = vand.u32 2147483647, %v1386
    %vm1466 = vcmp.eq.f32.partialorder %v1465, 8.507059e+37
    %v1467 = vand.u32 %v1386, 2147483648
    %v1468 = vor.u32 1.1754944e-38, %v1467
    %v1469 = vsel %vm1466, %v1468, %v1464
    %v1470 = vmul.f32 %v1365, %v1469
    %v1471 = vrcp.pop %v1389
    %v1472 = vmul.f32 %v1389, %v1471
    %v1473 = vsub.f32 1.0, %v1472
    %v1474 = vmul.f32 %v1471, %v1473
    %v1475 = vadd.f32 %v1471, %v1474
    %vm1476 = vweird.f32 %v1389
    %vm1477 = vweird.f32 %v1471
    %vm1478 = vmor %vm1476, %vm1477
    %v1479 = vsel %vm1478, %v1471, %v1475
    %v1480 = vand.u32 2147483647, %v1389
    %vm1481 = vcmp.eq.f32.partialorder %v1480, 8.507059e+37
    %v1482 = vand.u32 %v1389, 2147483648
    %v1483 = vor.u32 1.1754944e-38, %v1482
    %v1484 = vsel %vm1481, %v1483, %v1479
    %v1485 = vmul.f32 %v1367, %v1484
    %v1486 = vrcp.pop %v1392
    %v1487 = vmul.f32 %v1392, %v1486
    %v1488 = vsub.f32 1.0, %v1487
    %v1489 = vmul.f32 %v1486, %v1488
    %v1490 = vadd.f32 %v1486, %v1489
    %vm1491 = vweird.f32 %v1392
    %vm1492 = vweird.f32 %v1486
    %vm1493 = vmor %vm1491, %vm1492
    %v1494 = vsel %vm1493, %v1486, %v1490
    %v1495 = vand.u32 2147483647, %v1392
    %vm1496 = vcmp.eq.f32.partialorder %v1495, 8.507059e+37
    %v1497 = vand.u32 %v1392, 2147483648
    %v1498 = vor.u32 1.1754944e-38, %v1497
    %v1499 = vsel %vm1496, %v1498, %v1494
    %v1500 = vmul.f32 %v1369, %v1499
    %v1501 = vrcp.pop %v1395
    %v1502 = vmul.f32 %v1395, %v1501
    %v1503 = vsub.f32 1.0, %v1502
    %v1504 = vmul.f32 %v1501, %v1503
    %v1505 = vadd.f32 %v1501, %v1504
    %vm1506 = vweird.f32 %v1395
    %vm1507 = vweird.f32 %v1501
    %vm1508 = vmor %vm1506, %vm1507
    %v1509 = vsel %vm1508, %v1501, %v1505
    %v1510 = vand.u32 2147483647, %v1395
    %vm1511 = vcmp.eq.f32.partialorder %v1510, 8.507059e+37
    %v1512 = vand.u32 %v1395, 2147483648
    %v1513 = vor.u32 1.1754944e-38, %v1512
    %v1514 = vsel %vm1511, %v1513, %v1509
    %v1515 = vmul.f32 %v1371, %v1514
    %1516 = vrot.lane.b32.xlu0 %v1049, 96
    %v1517 = vpop.permute.xlu0 %1516
    %1518 = vrot.lane.b32.xlu0 %v1052, 96
    %v1519 = vpop.permute.xlu0 %1518
    %v1523 = vsel %vm871, %v1410, 0
    %1525 = vmatpush.msra.mxu0 0.0
    %1526 = vmatpush.msra.mxu0 0.0
    %1527 = vmatpush.msra.mxu0 0.0
    %1528 = vmatpush.msra.mxu0 0.0
    %1529 = vmatpush.msra.mxu0 0.0
    %1530 = vmatpush.msra.mxu0 0.0
    %1531 = vmatpush.msra.mxu0 0.0
    %1532 = vmatpush.msra.mxu0 0.0
    %1533 = vmatpush.msra.mxu0 0.0
    %1534 = vmatpush.msra.mxu0 0.0
    %1535 = vmatpush.msra.mxu0 0.0
    %1536 = vmatpush.msra.mxu0 0.0
    %1537 = vmatpush.msra.mxu0 0.0
    %1538 = vmatpush.msra.mxu0 0.0
    %1539 = vmatpush.msra.mxu0 %v1519
    %1540 = vmatpush.msra.mxu0 %v1517
    %1541 = vmatmul.f32.gmra.mxu0 %v1523
    %v1542 = vpop.f32.mrf.mxu0
    %v1543 = vadd.f32 0.0, %v1542
    %1544 = vdwg.mxu0
    %1545 = vrot.lane.b32.xlu0 %v1055, 96
    %v1546 = vpop.permute.xlu0 %1545
    %1547 = vrot.lane.b32.xlu0 %v1058, 96
    %v1548 = vpop.permute.xlu0 %1547
    %v1552 = vsel %vm871, %v1425, 0
    %1554 = vmatpush.msra.mxu0 0.0
    %1555 = vmatpush.msra.mxu0 0.0
    %1556 = vmatpush.msra.mxu0 0.0
    %1557 = vmatpush.msra.mxu0 0.0
    %1558 = vmatpush.msra.mxu0 0.0
    %1559 = vmatpush.msra.mxu0 0.0
    %1560 = vmatpush.msra.mxu0 0.0
    %1561 = vmatpush.msra.mxu0 0.0
    %1562 = vmatpush.msra.mxu0 0.0
    %1563 = vmatpush.msra.mxu0 0.0
    %1564 = vmatpush.msra.mxu0 0.0
    %1565 = vmatpush.msra.mxu0 0.0
    %1566 = vmatpush.msra.mxu0 0.0
    %1567 = vmatpush.msra.mxu0 0.0
    %1568 = vmatpush.msra.mxu0 %v1548
    %1569 = vmatpush.msra.mxu0 %v1546
    %1570 = vmatmul.f32.gmra.mxu0 %v1552
    %v1571 = vpop.f32.mrf.mxu0
    %v1572 = vadd.f32 0.0, %v1571
    %1573 = vdwg.mxu0
    %1574 = vrot.lane.b32.xlu0 %v1079, 96
    %v1575 = vpop.permute.xlu0 %1574
    %1576 = vrot.lane.b32.xlu0 %v1081, 96
    %v1577 = vpop.permute.xlu0 %1576
    %v1581 = vsel %vm871, %v1440, 0
    %1583 = vmatpush.msra.mxu0 0.0
    %1584 = vmatpush.msra.mxu0 0.0
    %1585 = vmatpush.msra.mxu0 0.0
    %1586 = vmatpush.msra.mxu0 0.0
    %1587 = vmatpush.msra.mxu0 0.0
    %1588 = vmatpush.msra.mxu0 0.0
    %1589 = vmatpush.msra.mxu0 0.0
    %1590 = vmatpush.msra.mxu0 0.0
    %1591 = vmatpush.msra.mxu0 0.0
    %1592 = vmatpush.msra.mxu0 0.0
    %1593 = vmatpush.msra.mxu0 0.0
    %1594 = vmatpush.msra.mxu0 0.0
    %1595 = vmatpush.msra.mxu0 0.0
    %1596 = vmatpush.msra.mxu0 0.0
    %1597 = vmatpush.msra.mxu0 %v1577
    %1598 = vmatpush.msra.mxu0 %v1575
    %1599 = vmatmul.f32.gmra.mxu0 %v1581
    %v1600 = vpop.f32.mrf.mxu0
    %v1601 = vadd.f32 0.0, %v1600
    %1602 = vdwg.mxu0
    %1603 = vrot.lane.b32.xlu0 %v1083, 96
    %v1604 = vpop.permute.xlu0 %1603
    %1605 = vrot.lane.b32.xlu0 %v1085, 96
    %v1606 = vpop.permute.xlu0 %1605
    %v1610 = vsel %vm871, %v1455, 0
    %1612 = vmatpush.msra.mxu0 0.0
    %1613 = vmatpush.msra.mxu0 0.0
    %1614 = vmatpush.msra.mxu0 0.0
    %1615 = vmatpush.msra.mxu0 0.0
    %1616 = vmatpush.msra.mxu0 0.0
    %1617 = vmatpush.msra.mxu0 0.0
    %1618 = vmatpush.msra.mxu0 0.0
    %1619 = vmatpush.msra.mxu0 0.0
    %1620 = vmatpush.msra.mxu0 0.0
    %1621 = vmatpush.msra.mxu0 0.0
    %1622 = vmatpush.msra.mxu0 0.0
    %1623 = vmatpush.msra.mxu0 0.0
    %1624 = vmatpush.msra.mxu0 0.0
    %1625 = vmatpush.msra.mxu0 0.0
    %1626 = vmatpush.msra.mxu0 %v1606
    %1627 = vmatpush.msra.mxu0 %v1604
    %1628 = vmatmul.f32.gmra.mxu0 %v1610
    %v1629 = vpop.f32.mrf.mxu0
    %v1630 = vadd.f32 0.0, %v1629
    %1631 = vdwg.mxu0
    %1632 = vrot.lane.b32.xlu0 %v1087, 96
    %v1633 = vpop.permute.xlu0 %1632
    %1634 = vrot.lane.b32.xlu0 %v1089, 96
    %v1635 = vpop.permute.xlu0 %1634
    %v1639 = vsel %vm871, %v1470, 0
    %1641 = vmatpush.msra.mxu0 0.0
    %1642 = vmatpush.msra.mxu0 0.0
    %1643 = vmatpush.msra.mxu0 0.0
    %1644 = vmatpush.msra.mxu0 0.0
    %1645 = vmatpush.msra.mxu0 0.0
    %1646 = vmatpush.msra.mxu0 0.0
    %1647 = vmatpush.msra.mxu0 0.0
    %1648 = vmatpush.msra.mxu0 0.0
    %1649 = vmatpush.msra.mxu0 0.0
    %1650 = vmatpush.msra.mxu0 0.0
    %1651 = vmatpush.msra.mxu0 0.0
    %1652 = vmatpush.msra.mxu0 0.0
    %1653 = vmatpush.msra.mxu0 0.0
    %1654 = vmatpush.msra.mxu0 0.0
    %1655 = vmatpush.msra.mxu0 %v1635
    %1656 = vmatpush.msra.mxu0 %v1633
    %1657 = vmatmul.f32.gmra.mxu0 %v1639
    %v1658 = vpop.f32.mrf.mxu0
    %v1659 = vadd.f32 0.0, %v1658
    %1660 = vdwg.mxu0
    %1661 = vrot.lane.b32.xlu0 %v1091, 96
    %v1662 = vpop.permute.xlu0 %1661
    %1663 = vrot.lane.b32.xlu0 %v1093, 96
    %v1664 = vpop.permute.xlu0 %1663
    %v1668 = vsel %vm871, %v1485, 0
    %1670 = vmatpush.msra.mxu0 0.0
    %1671 = vmatpush.msra.mxu0 0.0
    %1672 = vmatpush.msra.mxu0 0.0
    %1673 = vmatpush.msra.mxu0 0.0
    %1674 = vmatpush.msra.mxu0 0.0
    %1675 = vmatpush.msra.mxu0 0.0
    %1676 = vmatpush.msra.mxu0 0.0
    %1677 = vmatpush.msra.mxu0 0.0
    %1678 = vmatpush.msra.mxu0 0.0
    %1679 = vmatpush.msra.mxu0 0.0
    %1680 = vmatpush.msra.mxu0 0.0
    %1681 = vmatpush.msra.mxu0 0.0
    %1682 = vmatpush.msra.mxu0 0.0
    %1683 = vmatpush.msra.mxu0 0.0
    %1684 = vmatpush.msra.mxu0 %v1664
    %1685 = vmatpush.msra.mxu0 %v1662
    %1686 = vmatmul.f32.gmra.mxu0 %v1668
    %v1687 = vpop.f32.mrf.mxu0
    %v1688 = vadd.f32 0.0, %v1687
    %1689 = vdwg.mxu0
    %1690 = vrot.lane.b32.xlu0 %v1095, 96
    %v1691 = vpop.permute.xlu0 %1690
    %1692 = vrot.lane.b32.xlu0 %v1097, 96
    %v1693 = vpop.permute.xlu0 %1692
    %v1697 = vsel %vm871, %v1500, 0
    %1699 = vmatpush.msra.mxu0 0.0
    %1700 = vmatpush.msra.mxu0 0.0
    %1701 = vmatpush.msra.mxu0 0.0
    %1702 = vmatpush.msra.mxu0 0.0
    %1703 = vmatpush.msra.mxu0 0.0
    %1704 = vmatpush.msra.mxu0 0.0
    %1705 = vmatpush.msra.mxu0 0.0
    %1706 = vmatpush.msra.mxu0 0.0
    %1707 = vmatpush.msra.mxu0 0.0
    %1708 = vmatpush.msra.mxu0 0.0
    %1709 = vmatpush.msra.mxu0 0.0
    %1710 = vmatpush.msra.mxu0 0.0
    %1711 = vmatpush.msra.mxu0 0.0
    %1712 = vmatpush.msra.mxu0 0.0
    %1713 = vmatpush.msra.mxu0 %v1693
    %1714 = vmatpush.msra.mxu0 %v1691
    %1715 = vmatmul.f32.gmra.mxu0 %v1697
    %v1716 = vpop.f32.mrf.mxu0
    %v1717 = vadd.f32 0.0, %v1716
    %1718 = vdwg.mxu0
    %1719 = vrot.lane.b32.xlu0 %v1099, 96
    %v1720 = vpop.permute.xlu0 %1719
    %1721 = vrot.lane.b32.xlu0 %v1101, 96
    %v1722 = vpop.permute.xlu0 %1721
    %v1726 = vsel %vm871, %v1515, 0
    %1728 = vmatpush.msra.mxu0 0.0
    %1729 = vmatpush.msra.mxu0 0.0
    %1730 = vmatpush.msra.mxu0 0.0
    %1731 = vmatpush.msra.mxu0 0.0
    %1732 = vmatpush.msra.mxu0 0.0
    %1733 = vmatpush.msra.mxu0 0.0
    %1734 = vmatpush.msra.mxu0 0.0
    %1735 = vmatpush.msra.mxu0 0.0
    %1736 = vmatpush.msra.mxu0 0.0
    %1737 = vmatpush.msra.mxu0 0.0
    %1738 = vmatpush.msra.mxu0 0.0
    %1739 = vmatpush.msra.mxu0 0.0
    %1740 = vmatpush.msra.mxu0 0.0
    %1741 = vmatpush.msra.mxu0 0.0
    %1742 = vmatpush.msra.mxu0 %v1722
    %1743 = vmatpush.msra.mxu0 %v1720
    %1744 = vmatmul.f32.gmra.mxu0 %v1726
    %v1745 = vpop.f32.mrf.mxu0
    %v1746 = vadd.f32 0.0, %v1745
    %1747 = vdwg.mxu0
    %1750 = vrot.lane.b32.xlu0 %v1601, 8
    %v1751 = vpop.permute.xlu0 %1750
    %1752 = vrot.lane.b32.xlu0 %v1630, 8
    %v1753 = vpop.permute.xlu0 %1752
    %1758 = vrot.lane.b32.xlu0 %v1659, 16
    %v1759 = vpop.permute.xlu0 %1758
    %1760 = vrot.lane.b32.xlu0 %v1688, 16
    %v1761 = vpop.permute.xlu0 %1760
    %1766 = vrot.lane.b32.xlu0 %v1717, 24
    %v1767 = vpop.permute.xlu0 %1766
    %1768 = vrot.lane.b32.xlu0 %v1746, 24
    %v1769 = vpop.permute.xlu0 %1768
    %v1772 = vsel %vm230, %v1543, %v1751
    %v1773 = vsel %vm230, %v1572, %v1753
    %v1774 = vsel %vm871, %v1772, %v1759
    %v1775 = vsel %vm871, %v1773, %v1761
    %v1776 = vsel %vm874, %v1774, %v1767
    %v1777 = vsel %vm874, %v1775, %v1769
    %1778 = vrot.lane.b32.xlu0 %v95, 32
    %v1779 = vpop.permute.xlu0 %1778
    %1780 = vrot.lane.b32.xlu0 %v98, 32
    %v1781 = vpop.permute.xlu0 %1780
    %1782 = vrot.lane.b32.xlu0 %v101, 32
    %v1783 = vpop.permute.xlu0 %1782
    %1784 = vrot.lane.b32.xlu0 %v104, 32
    %v1785 = vpop.permute.xlu0 %1784
    %v1791 = vsel %vm127, %v1776, 0
    %v1794 = vsel %vm127, %v1777, 0
    %1796 = vmatpush.msra.mxu0 0.0
    %1797 = vmatpush.msra.mxu0 0.0
    %1798 = vmatpush.msra.mxu0 0.0
    %1799 = vmatpush.msra.mxu0 0.0
    %1800 = vmatpush.msra.mxu0 0.0
    %1801 = vmatpush.msra.mxu0 0.0
    %1802 = vmatpush.msra.mxu0 0.0
    %1803 = vmatpush.msra.mxu0 0.0
    %1804 = vmatpush.msra.mxu0 0.0
    %1805 = vmatpush.msra.mxu0 0.0
    %1806 = vmatpush.msra.mxu0 0.0
    %1807 = vmatpush.msra.mxu0 0.0
    %1808 = vmatpush.msra.mxu0 %v1785
    %1809 = vmatpush.msra.mxu0 %v1783
    %1810 = vmatpush.msra.mxu0 %v1781
    %1811 = vmatpush.msra.mxu0 %v1779
    %1812 = vmatmul.f32.gmra.mxu0 %v1791
    %v1813 = vpop.f32.mrf.mxu0
    %v1814 = vadd.f32 0.0, %v1813
    %1815 = vmatmul.f32.gmra.mxu0 %v1794
    %v1816 = vpop.f32.mrf.mxu0
    %v1817 = vadd.f32 0.0, %v1816
    %1818 = vdwg.mxu0
    %v1819 = vadd.f32 %v922, %v1814
    %v1820 = vadd.f32 %v923, %v1817
    %v1821 = vsel %vm127, %v1819, 0.0
    %1822 = vadd.xlane.f32.xlu0 %v1821
    %v1823 = vpop.xlane.xlu0 %1822
    %v1824 = vsel %vm127, %v1820, 0.0
    %1825 = vadd.xlane.f32.xlu0 %v1824
    %v1826 = vpop.xlane.xlu0 %1825
    %v1827 = vmul.f32 %v1823, %v140
    %v1828 = vmul.f32 %v1826, %v140
    %v1829 = vsub.f32 %v1819, %v1827
    %v1830 = vsub.f32 %v1820, %v1828
    %v1831 = vmul.f32 %v1829, %v1829
    %v1832 = vmul.f32 %v1830, %v1830
    %v1833 = vsel %vm127, %v1831, 0.0
    %1834 = vadd.xlane.f32.xlu0 %v1833
    %v1835 = vpop.xlane.xlu0 %1834
    %v1836 = vsel %vm127, %v1832, 0.0
    %1837 = vadd.xlane.f32.xlu0 %v1836
    %v1838 = vpop.xlane.xlu0 %1837
    %v1839 = vmul.f32 %v1835, 0.032258064
    %v1840 = vmul.f32 %v1838, 0.032258064
    %v1841 = vperm.slane %v106, 4
    %v1842 = vmul.f32 %v1841, %v1829
    %v1843 = vmul.f32 %v1841, %v1830
    %v1844 = vadd.f32 %v1839, 1e-06
    %v1845 = vadd.f32 %v1840, 1e-06
    %v1846 = vrsqrt.pop %v1844
    %v1847 = vmul.f32 %v1846, %v1844
    %v1848 = vmul.f32 %v1847, %v1846
    %v1849 = vmul.f32 0.5, %v1848
    %v1850 = vsub.f32 1.5, %v1849
    %v1851 = vmul.f32 %v1846, %v1850
    %vm1852 = vweird.f32 %v1844
    %vm1853 = vweird.f32 %v1846
    %vm1854 = vmor %vm1852, %vm1853
    %v1855 = vsel %vm1854, %v1846, %v1851
    %v1856 = vrsqrt.pop %v1845
    %v1857 = vmul.f32 %v1856, %v1845
    %v1858 = vmul.f32 %v1857, %v1856
    %v1859 = vmul.f32 0.5, %v1858
    %v1860 = vsub.f32 1.5, %v1859
    %v1861 = vmul.f32 %v1856, %v1860
    %vm1862 = vweird.f32 %v1845
    %vm1863 = vweird.f32 %v1856
    %vm1864 = vmor %vm1862, %vm1863
    %v1865 = vsel %vm1864, %v1856, %v1861
    %v1866 = vmul.f32 %v1842, %v1855
    %v1867 = vmul.f32 %v1843, %v1865
    %v1868 = vperm.slane %v106, 5
    %v1869 = vadd.f32 %v1866, %v1868
    %v1870 = vadd.f32 %v1867, %v1868
    %v1871 = vperm.slane %v106, 6
    %v1873 = vsel %vm127, %v1869, 0
    %v1876 = vsel %vm127, %v1870, 0
    %1878 = vmatpush.msra.mxu0 0.0
    %1879 = vmatpush.msra.mxu0 0.0
    %1880 = vmatpush.msra.mxu0 0.0
    %1881 = vmatpush.msra.mxu0 0.0
    %1882 = vmatpush.msra.mxu0 0.0
    %1883 = vmatpush.msra.mxu0 0.0
    %1884 = vmatpush.msra.mxu0 0.0
    %1885 = vmatpush.msra.mxu0 0.0
    %1886 = vmatpush.msra.mxu0 0.0
    %1887 = vmatpush.msra.mxu0 0.0
    %1888 = vmatpush.msra.mxu0 0.0
    %1889 = vmatpush.msra.mxu0 0.0
    %1890 = vmatpush.msra.mxu0 %v105
    %1891 = vmatpush.msra.mxu0 %v102
    %1892 = vmatpush.msra.mxu0 %v99
    %1893 = vmatpush.msra.mxu0 %v96
    %1894 = vmatmul.f32.gmra.mxu0 %v1873
    %v1895 = vpop.f32.mrf.mxu0
    %v1896 = vadd.f32 %v1871, %v1895
    %1897 = vmatmul.f32.gmra.mxu0 %v1876
    %v1898 = vpop.f32.mrf.mxu0
    %v1899 = vadd.f32 %v1871, %v1898
    %1900 = vdwg.mxu0
    %v1901 = vmax.f32 %v1896, 0.0
    %v1902 = vmax.f32 %v1899, 0.0
    %v1903 = vperm.slane %v106, 7
    %vm1904 = vcmask 523264
    %v1906 = vsel %vm1904, %v1901, 0
    %v1909 = vsel %vm1904, %v1902, 0
    %1911 = vmatpush.msra.mxu0 0.0
    %1912 = vmatpush.msra.mxu0 0.0
    %1913 = vmatpush.msra.mxu0 0.0
    %1914 = vmatpush.msra.mxu0 0.0
    %1915 = vmatpush.msra.mxu0 0.0
    %1916 = vmatpush.msra.mxu0 0.0
    %1917 = vmatpush.msra.mxu0 0.0
    %1918 = vmatpush.msra.mxu0 0.0
    %1919 = vmatpush.msra.mxu0 %v114
    %1920 = vmatpush.msra.mxu0 %v113
    %1921 = vmatpush.msra.mxu0 %v112
    %1922 = vmatpush.msra.mxu0 %v111
    %1923 = vmatpush.msra.mxu0 %v110
    %1924 = vmatpush.msra.mxu0 %v109
    %1925 = vmatpush.msra.mxu0 %v108
    %1926 = vmatpush.msra.mxu0 %v107
    %1927 = vmatmul.f32.gmra.mxu0 %v1906
    %v1928 = vpop.f32.mrf.mxu0
    %v1929 = vadd.f32 %v1903, %v1928
    %1930 = vmatmul.f32.gmra.mxu0 %v1909
    %v1931 = vpop.f32.mrf.mxu0
    %v1932 = vadd.f32 %v1903, %v1931
    %1933 = vdwg.mxu0
    %v1934 = vadd.f32 %v1819, %v1929
    %v1935 = vadd.f32 %v1820, %v1932
    %1936 = vst.msk [vmem:[#allocation10] sm:$0xff] %vm127, %v1934
    %1937 = vst.msk [vmem:[#allocation10 + $0x8] sm:$0xff] %vm127, %v1935
    // Predicated region
    $region46: #{tpu_custom_call.1} parent=1 // pred_check
      _
    $region47: #{tpu_custom_call.1} parent=1 // pred_check_branch
      %1939 = sbr.rel (0) target = $region49
    $region48: #{tpu_custom_call.1} parent=1 // pred_region
      %1941 = vsyncadd [#allocation4], 0
      %s1942 = sshll.u32 [#allocation10], 4
      %s1943 = int_to_ptr.vmem [resolvable:$true] %s1942
      %s1944 = sshll.u32 %s7, 4
      %s1945 = int_to_ptr.hbm [resolvable:$true] %s1944
      %1950 = dma.vmem_to_hbm [thread:$0]  %s1943, 256, %s1945, [#allocation4], 128, 128, 8
    $region49: #{tpu_custom_call.1} parent=1 // pred_fallthru
      _
    // Predicated region
    $region50: #{tpu_custom_call.1} parent=1 // pred_check
      _
    $region51: #{tpu_custom_call.1} parent=1 // pred_check_branch
      %1952 = sbr.rel (0) target = $region53
    $region52: #{tpu_custom_call.1} parent=1 // pred_region
      %1954 = dma.done [#allocation4], 256
    $region53: #{tpu_custom_call.1} parent=1 // pred_fallthru
      _
    %1955 = vsyncpa [#allocation3], 1
    %1956 = vsyncpa [#allocation6], 1
    %1957 = vsyncpa [#allocation9], 1
    %1958 = vsyncpa [#allocation4], 1

</llo_original>
